<compile_context>
chip_gen: v7x
topology: tpu7x:2x2x1
jax: 0.10.0
libtpu: 0.0.40
codegen_flags: <defaults>
</compile_context>

<pallas_src>
import functools

import jax
import jax.numpy as jnp
from jax import lax
from jax.experimental import pallas as pl
from jax.experimental.pallas import tpu as pltpu


def _flash_cross_attn_kernel(x_ref, ctx_ref, wq_ref, wk_ref, wv_ref, wo_ref,
                             bo_ref, o_ref, q_sc, m_sc, l_sc, acc_sc,
                             *, heads, dim_head, scale):
    """Grid = (batch, q-tile, kv-tile); kv is the last ("arbitrary") reduction axis."""
    ki = pl.program_id(2)

    # ---- init (kv == 0): project this q tile once, reset online-softmax state.
    @pl.when(ki == 0)
    def _init():
        x = x_ref[0]                                                   # (tq, Dq) bf16
        q = jnp.dot(x, wq_ref[...],
                    preferred_element_type=jnp.float32) * scale        # (tq, inner) f32
        for h in range(heads):                                         # static unroll
            lo = h * dim_head
            q_sc[h] = q[:, lo:lo + dim_head].astype(q_sc.dtype)        # (tq, dh) bf16
        m_sc[...] = jnp.full(m_sc.shape, -jnp.inf, m_sc.dtype)
        l_sc[...] = jnp.zeros(l_sc.shape, l_sc.dtype)
        acc_sc[...] = jnp.zeros(acc_sc.shape, acc_sc.dtype)

    # ---- per kv tile: project k/v wide (full-Dc contraction on the MXU), then
    #      per-head online softmax.  QK^T contracts the last dims directly
    #      (no explicit k.T / XLU transpose).
    c = ctx_ref[0]                                                     # (tk, Dc) bf16
    k = jnp.dot(c, wk_ref[...],
                preferred_element_type=jnp.float32).astype(jnp.bfloat16)    # (tk, inner)
    v = jnp.dot(c, wv_ref[...],
                preferred_element_type=jnp.float32).astype(jnp.bfloat16)    # (tk, inner)

    dn = (((1,), (1,)), ((), ()))   # contract last dims: q_h @ k_h^T
    for h in range(heads):          # static unroll; scores are per-head by definition
        lo = h * dim_head
        kh = k[:, lo:lo + dim_head]                                    # (tk, dh) bf16
        vh = v[:, lo:lo + dim_head]                                    # (tk, dh) bf16

        s = lax.dot_general(q_sc[h], kh, dn,
                            preferred_element_type=jnp.float32)        # (tq, tk) f32
        m_prev = m_sc[h]                                               # (tq, 1) f32
        m_new = jnp.maximum(m_prev, jnp.max(s, axis=-1, keepdims=True))
        alpha = jnp.exp(m_prev - m_new)                                # f32 rescale
        # TODO(synk): on v6e/v7x the exp / p-scaling below could run in bf16
        # (keeping m/l in f32); kept f32 so the same kernel is also right on v5e.
        p = jnp.exp(s - m_new)                                         # (tq, tk) f32
        l_sc[h] = alpha * l_sc[h] + jnp.sum(p, axis=-1, keepdims=True)
        acc_sc[h] = alpha * acc_sc[h] + jnp.dot(
            p.astype(jnp.bfloat16), vh, preferred_element_type=jnp.float32)
        m_sc[h] = m_new

    # ---- finalize (last kv step): normalize, per-head output projection, bias.
    @pl.when(ki == pl.num_programs(2) - 1)
    def _finalize():
        inv_l = pl.reciprocal(l_sc[...], approx=True)                  # (H, tq, 1)
        res = None
        for h in range(heads):
            out_h = (acc_sc[h] * inv_l[h]).astype(jnp.bfloat16)        # (tq, dh)
            part = jnp.dot(out_h, wo_ref[h],
                           preferred_element_type=jnp.float32)         # (tq, Dq)
            res = part if res is None else res + part
        res = res + bo_ref[...]                                        # (1, Dq) broadcast
        o_ref[0] = res.astype(o_ref.dtype)


def _choose_tile(dim, pref):
    """Largest tile <= pref dividing dim that satisfies the (8,128) sublane rule."""
    pref = min(pref, dim)
    if dim % pref == 0 and (pref % 8 == 0 or pref == dim):
        return pref
    return dim  # fall back to a single (untiled) block


def cross_attention(x, context, wq, wk, wv, wo, bo, *, heads, dim_head,
                    q_tile=256, kv_tile=256):
    """x: (B, N, query_dim), context: (B, M, context_dim).

    wq/wk/wv: nn.Linear weights (inner_dim, in_dim); wo: to_out[0].weight
    (query_dim, inner_dim); bo: (query_dim,).
    """
    B, N, Dq = x.shape
    _, M, Dc = context.shape
    inner = heads * dim_head
    assert wq.shape == (inner, Dq) and wk.shape == (inner, Dc)
    assert wv.shape == (inner, Dc) and wo.shape == (Dq, inner)
    scale = float(dim_head) ** -0.5

    tq = _choose_tile(N, q_tile)
    tk = _choose_tile(M, kv_tile)
    nq = N // tq
    nk = M // tk

    # Layout / dtype plumbing (once, outside the kernel): nn.Linear stores W as
    # (out, in); the kernel wants (in, out) so y = x @ W^T is a plain dot.
    # Feed the MXU bf16; accumulate f32 inside the kernel.
    cdt = jnp.bfloat16
    x_c = x.astype(cdt)
    ctx_c = context.astype(cdt)
    wq_t = wq.T.astype(cdt)                                    # (Dq, inner)
    wk_t = wk.T.astype(cdt)                                    # (Dc, inner)
    wv_t = wv.T.astype(cdt)                                    # (Dc, inner)
    wo_r = wo.T.reshape(heads, dim_head, Dq).astype(cdt)       # (H, dh, Dq)
    bo_2d = bo.reshape(1, Dq).astype(jnp.float32)

    kernel = functools.partial(_flash_cross_attn_kernel,
                               heads=heads, dim_head=dim_head, scale=scale)

    # TODO(synk): optional `mask` argument (masked_fill before softmax) not wired in.
    # TODO(synk): if Dq < 128 in a deployed config, pad Dq (weights/bias/output)
    # to 128 so output stores are unmasked lane-dense vst.
    return pl.pallas_call(
        kernel,
        out_shape=jax.ShapeDtypeStruct((B, N, Dq), x.dtype),
        grid_spec=pltpu.PrefetchScalarGridSpec(
            num_scalar_prefetch=0,
            grid=(B, nq, nk),
            in_specs=[
                pl.BlockSpec((1, tq, Dq), lambda b, qi, ki: (b, qi, 0)),   # x (q tile)
                pl.BlockSpec((1, tk, Dc), lambda b, qi, ki: (b, ki, 0)),   # context (kv tile)
                # Weight/bias block indices never change -> fetched once, VMEM-resident.
                pl.BlockSpec((Dq, inner), lambda b, qi, ki: (0, 0)),       # Wq^T
                pl.BlockSpec((Dc, inner), lambda b, qi, ki: (0, 0)),       # Wk^T
                pl.BlockSpec((Dc, inner), lambda b, qi, ki: (0, 0)),       # Wv^T
                pl.BlockSpec((heads, dim_head, Dq),
                             lambda b, qi, ki: (0, 0, 0)),                 # Wo^T per head
                pl.BlockSpec((1, Dq), lambda b, qi, ki: (0, 0)),           # bias
            ],
            out_specs=pl.BlockSpec((1, tq, Dq), lambda b, qi, ki: (b, qi, 0)),
            scratch_shapes=[
                pltpu.VMEM((heads, tq, dim_head), jnp.bfloat16),   # cached scaled q
                pltpu.VMEM((heads, tq, 1), jnp.float32),           # running max
                pltpu.VMEM((heads, tq, 1), jnp.float32),           # running sum
                pltpu.VMEM((heads, tq, dim_head), jnp.float32),    # output accumulator
            ]),
        compiler_params=pltpu.CompilerParams(
            dimension_semantics=("parallel", "parallel", "arbitrary"),
            vmem_limit_bytes=64 * 1024 * 1024),
    )(x_c, ctx_c, wq_t, wk_t, wv_t, wo_r, bo_2d)


def _reference(x, context, wq, wk, wv, wo, bo, *, heads, dim_head):
    """Pure-JAX f32 reference matching the PyTorch forward (no mask, dropout=0)."""
    B, N, Dq = x.shape
    scale = float(dim_head) ** -0.5
    q = x @ wq.T
    k = context @ wk.T
    v = context @ wv.T

    def split(t):
        b, n, _ = t.shape
        return t.reshape(b, n, heads, dim_head).transpose(0, 2, 1, 3)

    q, k, v = split(q), split(k), split(v)                         # (B, H, N, dh)
    sim = jnp.einsum('bhid,bhjd->bhij', q.astype(jnp.float32),
                     k.astype(jnp.float32)) * scale
    attn = jax.nn.softmax(sim, axis=-1)
    out = jnp.einsum('bhij,bhjd->bhid', attn, v)                   # (B, H, N, dh)
    out = out.transpose(0, 2, 1, 3).reshape(B, N, heads * dim_head)
    return out @ wo.T + bo


if __name__ == "__main__":
    # Small shapes consistent with the module's forward.
    B, N, query_dim = 2, 16, 32
    heads, dim_head = 2, 16
    inner = heads * dim_head
    context_dim = query_dim  # context=None -> self-attention

    key = jax.random.PRNGKey(0)
    kx, kq, kk, kv, ko, kb = jax.random.split(key, 6)
    x = jax.random.normal(kx, (B, N, query_dim), dtype=jnp.float32)
    wq = jax.random.normal(kq, (inner, query_dim), dtype=jnp.float32) * 0.05
    wk = jax.random.normal(kk, (inner, context_dim), dtype=jnp.float32) * 0.05
    wv = jax.random.normal(kv, (inner, context_dim), dtype=jnp.float32) * 0.05
    wo = jax.random.normal(ko, (query_dim, inner), dtype=jnp.float32) * 0.05
    bo = jax.random.normal(kb, (query_dim,), dtype=jnp.float32) * 0.05

    context = x  # default(context, x) — self-attention path

    # Small q/kv tiles so the test exercises the multi-tile online-softmax path
    # (grid = (B, 2, 2)); production defaults are 256.
    out = cross_attention(x, context, wq, wk, wv, wo, bo,
                          heads=heads, dim_head=dim_head, q_tile=8, kv_tile=8)
    out = jax.block_until_ready(out)

    ref = _reference(x, context, wq, wk, wv, wo, bo,
                     heads=heads, dim_head=dim_head)
    assert out.shape == (B, N, query_dim)
    err = float(jnp.max(jnp.abs(out - ref)))
    # bf16 MXU inputs + approximate softmax reciprocal -> loosened tolerance
    # vs. the exact-f32 reference.
    assert jnp.allclose(out, ref, atol=2e-2, rtol=2e-2), err

    print("KERNEL_OK")
</pallas_src>

<mosaic_0001>
module attributes {stable_mosaic.version = 11 : i64} {
  func.func @_flash_cross_attn_kernel(%arg0: i32, %arg1: i32, %arg2: i32, %arg3: memref<1x8x32xbf16, #tpu.memory_space<vmem>>, %arg4: memref<1x8x32xbf16, #tpu.memory_space<vmem>>, %arg5: memref<32x32xbf16, #tpu.memory_space<vmem>>, %arg6: memref<32x32xbf16, #tpu.memory_space<vmem>>, %arg7: memref<32x32xbf16, #tpu.memory_space<vmem>>, %arg8: memref<2x16x32xbf16, #tpu.memory_space<vmem>>, %arg9: memref<1x32xf32, #tpu.memory_space<vmem>>, %arg10: memref<1x8x32xf32, #tpu.memory_space<vmem>>, %arg11: memref<2x8x16xbf16, #tpu.memory_space<vmem>>, %arg12: memref<2x8x1xf32, #tpu.memory_space<vmem>>, %arg13: memref<2x8x1xf32, #tpu.memory_space<vmem>>, %arg14: memref<2x8x16xf32, #tpu.memory_space<vmem>>) attributes {dimension_semantics = [#tpu.dimension_semantics<parallel>, #tpu.dimension_semantics<parallel>, #tpu.dimension_semantics<arbitrary>], iteration_bounds = array<i64: 2, 2, 2>, scalar_prefetch = 0 : i64, scratch_operands = 4 : i64, tpu.core_type = #tpu.core_type<tc>, window_params = [{transform_indices = @transform_0, window_bounds = array<i64: 1, 8, 32>}, {transform_indices = @transform_1, window_bounds = array<i64: 1, 8, 32>}, {pipeline_mode = #tpu.pipeline_mode<synchronous>, transform_indices = @transform_2, window_bounds = array<i64: 32, 32>}, {pipeline_mode = #tpu.pipeline_mode<synchronous>, transform_indices = @transform_3, window_bounds = array<i64: 32, 32>}, {pipeline_mode = #tpu.pipeline_mode<synchronous>, transform_indices = @transform_4, window_bounds = array<i64: 32, 32>}, {pipeline_mode = #tpu.pipeline_mode<synchronous>, transform_indices = @transform_5, window_bounds = array<i64: 2, 16, 32>}, {pipeline_mode = #tpu.pipeline_mode<synchronous>, transform_indices = @transform_6, window_bounds = array<i64: 1, 32>}, {transform_indices = @transform_7, window_bounds = array<i64: 1, 8, 32>}]} {
    %c0_i32 = arith.constant 0 : i32
    %0 = arith.cmpi eq, %arg2, %c0_i32 : i32
    %1 = arith.extui %0 : i1 to i32
    %c0_i32_0 = arith.constant 0 : i32
    %2 = arith.cmpi ne, %1, %c0_i32_0 : i32
    scf.if %2 {
      %c0_58 = arith.constant 0 : index
      %c0_59 = arith.constant 0 : index
      %c0_60 = arith.constant 0 : index
      %88 = vector.load %arg3[%c0_58, %c0_59, %c0_60] : memref<1x8x32xbf16, #tpu.memory_space<vmem>>, vector<1x8x32xbf16>
      %89 = vector.shape_cast %88 : vector<1x8x32xbf16> to vector<8x32xbf16>
      %c0_61 = arith.constant 0 : index
      %c0_62 = arith.constant 0 : index
      %90 = vector.load %arg5[%c0_61, %c0_62] : memref<32x32xbf16, #tpu.memory_space<vmem>>, vector<32x32xbf16>
      %cst_63 = arith.constant dense<0.000000e+00> : vector<8x32xf32>
      %91 = tpu.matmul %89, %90, %cst_63 {dimension_numbers = #tpu.dot_dimension_numbers<[1], [0], [0], [1], [0, 0, 1, 1], [], []>} : vector<8x32xbf16>, vector<32x32xbf16>, vector<8x32xf32> -> vector<8x32xf32>
      %cst_64 = arith.constant 2.500000e-01 : f32
      %92 = vector.broadcast %cst_64 : f32 to vector<8x32xf32>
      %93 = arith.mulf %91, %92 : vector<8x32xf32>
      %94 = vector.extract_strided_slice %93 {offsets = [0, 0], sizes = [8, 16], strides = [1, 1]} : vector<8x32xf32> to vector<8x16xf32>
      %95 = arith.truncf %94 : vector<8x16xf32> to vector<8x16xbf16>
      %c0_65 = arith.constant 0 : index
      %c0_66 = arith.constant 0 : index
      %c0_67 = arith.constant 0 : index
      %96 = vector.load %arg11[%c0_65, %c0_66, %c0_67] : memref<2x8x16xbf16, #tpu.memory_space<vmem>>, vector<1x8x16xbf16>
      %97 = vector.shape_cast %96 : vector<1x8x16xbf16> to vector<8x16xbf16>
      %98 = vector.shape_cast %95 : vector<8x16xbf16> to vector<1x8x16xbf16>
      tpu.vector_store %arg11[%c0_65, %c0_66, %c0_67], %98 {strides = array<i32>} : memref<2x8x16xbf16, #tpu.memory_space<vmem>>, vector<1x8x16xbf16>,
      %99 = vector.extract_strided_slice %93 {offsets = [0, 16], sizes = [8, 16], strides = [1, 1]} : vector<8x32xf32> to vector<8x16xf32>
      %100 = arith.truncf %99 : vector<8x16xf32> to vector<8x16xbf16>
      %c1_68 = arith.constant 1 : index
      %c0_69 = arith.constant 0 : index
      %c0_70 = arith.constant 0 : index
      %101 = vector.load %arg11[%c1_68, %c0_69, %c0_70] : memref<2x8x16xbf16, #tpu.memory_space<vmem>>, vector<1x8x16xbf16>
      %102 = vector.shape_cast %101 : vector<1x8x16xbf16> to vector<8x16xbf16>
      %103 = vector.shape_cast %100 : vector<8x16xbf16> to vector<1x8x16xbf16>
      tpu.vector_store %arg11[%c1_68, %c0_69, %c0_70], %103 {strides = array<i32>} : memref<2x8x16xbf16, #tpu.memory_space<vmem>>, vector<1x8x16xbf16>,
      %cst_71 = arith.constant 0xFF800000 : f32
      %104 = vector.broadcast %cst_71 : f32 to vector<2x8x1xf32>
      %c0_72 = arith.constant 0 : index
      %c0_73 = arith.constant 0 : index
      %c0_74 = arith.constant 0 : index
      %105 = vector.load %arg12[%c0_72, %c0_73, %c0_74] : memref<2x8x1xf32, #tpu.memory_space<vmem>>, vector<2x8x1xf32>
      tpu.vector_store %arg12[%c0_72, %c0_73, %c0_74], %104 {strides = array<i32>} : memref<2x8x1xf32, #tpu.memory_space<vmem>>, vector<2x8x1xf32>,
      %cst_75 = arith.constant 0.000000e+00 : f32
      %106 = vector.broadcast %cst_75 : f32 to vector<2x8x1xf32>
      %c0_76 = arith.constant 0 : index
      %c0_77 = arith.constant 0 : index
      %c0_78 = arith.constant 0 : index
      %107 = vector.load %arg13[%c0_76, %c0_77, %c0_78] : memref<2x8x1xf32, #tpu.memory_space<vmem>>, vector<2x8x1xf32>
      tpu.vector_store %arg13[%c0_76, %c0_77, %c0_78], %106 {strides = array<i32>} : memref<2x8x1xf32, #tpu.memory_space<vmem>>, vector<2x8x1xf32>,
      %cst_79 = arith.constant 0.000000e+00 : f32
      %108 = vector.broadcast %cst_79 : f32 to vector<2x8x16xf32>
      %c0_80 = arith.constant 0 : index
      %c0_81 = arith.constant 0 : index
      %c0_82 = arith.constant 0 : index
      %109 = vector.load %arg14[%c0_80, %c0_81, %c0_82] : memref<2x8x16xf32, #tpu.memory_space<vmem>>, vector<2x8x16xf32>
      tpu.vector_store %arg14[%c0_80, %c0_81, %c0_82], %108 {strides = array<i32>} : memref<2x8x16xf32, #tpu.memory_space<vmem>>, vector<2x8x16xf32>,
    } else {
    }
    %c0 = arith.constant 0 : index
    %c0_1 = arith.constant 0 : index
    %c0_2 = arith.constant 0 : index
    %3 = vector.load %arg4[%c0, %c0_1, %c0_2] : memref<1x8x32xbf16, #tpu.memory_space<vmem>>, vector<1x8x32xbf16>
    %4 = vector.shape_cast %3 : vector<1x8x32xbf16> to vector<8x32xbf16>
    %c0_3 = arith.constant 0 : index
    %c0_4 = arith.constant 0 : index
    %5 = vector.load %arg6[%c0_3, %c0_4] : memref<32x32xbf16, #tpu.memory_space<vmem>>, vector<32x32xbf16>
    %cst = arith.constant dense<0.000000e+00> : vector<8x32xf32>
    %6 = tpu.matmul %4, %5, %cst {dimension_numbers = #tpu.dot_dimension_numbers<[1], [0], [0], [1], [0, 0, 1, 1], [], []>} : vector<8x32xbf16>, vector<32x32xbf16>, vector<8x32xf32> -> vector<8x32xf32>
    %7 = arith.truncf %6 : vector<8x32xf32> to vector<8x32xbf16>
    %c0_5 = arith.constant 0 : index
    %c0_6 = arith.constant 0 : index
    %8 = vector.load %arg7[%c0_5, %c0_6] : memref<32x32xbf16, #tpu.memory_space<vmem>>, vector<32x32xbf16>
    %cst_7 = arith.constant dense<0.000000e+00> : vector<8x32xf32>
    %9 = tpu.matmul %4, %8, %cst_7 {dimension_numbers = #tpu.dot_dimension_numbers<[1], [0], [0], [1], [0, 0, 1, 1], [], []>} : vector<8x32xbf16>, vector<32x32xbf16>, vector<8x32xf32> -> vector<8x32xf32>
    %10 = arith.truncf %9 : vector<8x32xf32> to vector<8x32xbf16>
    %11 = vector.extract_strided_slice %7 {offsets = [0, 0], sizes = [8, 16], strides = [1, 1]} : vector<8x32xbf16> to vector<8x16xbf16>
    %12 = vector.extract_strided_slice %10 {offsets = [0, 0], sizes = [8, 16], strides = [1, 1]} : vector<8x32xbf16> to vector<8x16xbf16>
    %c0_8 = arith.constant 0 : index
    %c0_9 = arith.constant 0 : index
    %c0_10 = arith.constant 0 : index
    %13 = vector.load %arg11[%c0_8, %c0_9, %c0_10] : memref<2x8x16xbf16, #tpu.memory_space<vmem>>, vector<1x8x16xbf16>
    %14 = vector.shape_cast %13 : vector<1x8x16xbf16> to vector<8x16xbf16>
    %cst_11 = arith.constant dense<0.000000e+00> : vector<8x8xf32>
    %15 = tpu.matmul %14, %11, %cst_11 {dimension_numbers = #tpu.dot_dimension_numbers<[1], [1], [0], [0], [0, 0, 1, 0], [], []>} : vector<8x16xbf16>, vector<8x16xbf16>, vector<8x8xf32> -> vector<8x8xf32>
    %c0_12 = arith.constant 0 : index
    %c0_13 = arith.constant 0 : index
    %c0_14 = arith.constant 0 : index
    %16 = vector.load %arg12[%c0_12, %c0_13, %c0_14] : memref<2x8x1xf32, #tpu.memory_space<vmem>>, vector<1x8x1xf32>
    %17 = vector.shape_cast %16 : vector<1x8x1xf32> to vector<8x1xf32>
    %cst_15 = arith.constant dense<0xFF800000> : vector<8xf32>
    %18 = vector.multi_reduction <maximumf>, %15, %cst_15 [1] : vector<8x8xf32> to vector<8xf32>
    %19 = vector.shape_cast %18 : vector<8xf32> to vector<8x1xf32>
    %20 = arith.maximumf %17, %19 : vector<8x1xf32>
    %21 = arith.subf %17, %20 : vector<8x1xf32>
    %22 = math.exp %21 : vector<8x1xf32>
    %23 = vector.broadcast %20 : vector<8x1xf32> to vector<8x8xf32>
    %24 = arith.subf %15, %23 : vector<8x8xf32>
    %25 = math.exp %24 : vector<8x8xf32>
    %c0_16 = arith.constant 0 : index
    %c0_17 = arith.constant 0 : index
    %c0_18 = arith.constant 0 : index
    %26 = vector.load %arg13[%c0_16, %c0_17, %c0_18] : memref<2x8x1xf32, #tpu.memory_space<vmem>>, vector<1x8x1xf32>
    %27 = vector.shape_cast %26 : vector<1x8x1xf32> to vector<8x1xf32>
    %28 = arith.mulf %22, %27 : vector<8x1xf32>
    %cst_19 = arith.constant dense<0.000000e+00> : vector<8xf32>
    %29 = vector.multi_reduction <add>, %25, %cst_19 [1] : vector<8x8xf32> to vector<8xf32>
    %30 = vector.shape_cast %29 : vector<8xf32> to vector<8x1xf32>
    %31 = arith.addf %28, %30 : vector<8x1xf32>
    %c0_20 = arith.constant 0 : index
    %c0_21 = arith.constant 0 : index
    %c0_22 = arith.constant 0 : index
    %32 = vector.load %arg13[%c0_20, %c0_21, %c0_22] : memref<2x8x1xf32, #tpu.memory_space<vmem>>, vector<1x8x1xf32>
    %33 = vector.shape_cast %32 : vector<1x8x1xf32> to vector<8x1xf32>
    %34 = vector.shape_cast %31 : vector<8x1xf32> to vector<1x8x1xf32>
    tpu.vector_store %arg13[%c0_20, %c0_21, %c0_22], %34 {strides = array<i32>} : memref<2x8x1xf32, #tpu.memory_space<vmem>>, vector<1x8x1xf32>,
    %c0_23 = arith.constant 0 : index
    %c0_24 = arith.constant 0 : index
    %c0_25 = arith.constant 0 : index
    %35 = vector.load %arg14[%c0_23, %c0_24, %c0_25] : memref<2x8x16xf32, #tpu.memory_space<vmem>>, vector<1x8x16xf32>
    %36 = vector.shape_cast %35 : vector<1x8x16xf32> to vector<8x16xf32>
    %37 = vector.broadcast %22 : vector<8x1xf32> to vector<8x16xf32>
    %38 = arith.mulf %37, %36 : vector<8x16xf32>
    %39 = arith.truncf %25 : vector<8x8xf32> to vector<8x8xbf16>
    %cst_26 = arith.constant dense<0.000000e+00> : vector<8x16xf32>
    %40 = tpu.matmul %39, %12, %cst_26 {dimension_numbers = #tpu.dot_dimension_numbers<[1], [0], [0], [1], [0, 0, 1, 1], [], []>} : vector<8x8xbf16>, vector<8x16xbf16>, vector<8x16xf32> -> vector<8x16xf32>
    %41 = arith.addf %38, %40 : vector<8x16xf32>
    %c0_27 = arith.constant 0 : index
    %c0_28 = arith.constant 0 : index
    %c0_29 = arith.constant 0 : index
    %42 = vector.load %arg14[%c0_27, %c0_28, %c0_29] : memref<2x8x16xf32, #tpu.memory_space<vmem>>, vector<1x8x16xf32>
    %43 = vector.shape_cast %42 : vector<1x8x16xf32> to vector<8x16xf32>
    %44 = vector.shape_cast %41 : vector<8x16xf32> to vector<1x8x16xf32>
    tpu.vector_store %arg14[%c0_27, %c0_28, %c0_29], %44 {strides = array<i32>} : memref<2x8x16xf32, #tpu.memory_space<vmem>>, vector<1x8x16xf32>,
    %c0_30 = arith.constant 0 : index
    %c0_31 = arith.constant 0 : index
    %c0_32 = arith.constant 0 : index
    %45 = vector.load %arg12[%c0_30, %c0_31, %c0_32] : memref<2x8x1xf32, #tpu.memory_space<vmem>>, vector<1x8x1xf32>
    %46 = vector.shape_cast %45 : vector<1x8x1xf32> to vector<8x1xf32>
    %47 = vector.shape_cast %20 : vector<8x1xf32> to vector<1x8x1xf32>
    tpu.vector_store %arg12[%c0_30, %c0_31, %c0_32], %47 {strides = array<i32>} : memref<2x8x1xf32, #tpu.memory_space<vmem>>, vector<1x8x1xf32>,
    %48 = vector.extract_strided_slice %7 {offsets = [0, 16], sizes = [8, 16], strides = [1, 1]} : vector<8x32xbf16> to vector<8x16xbf16>
    %49 = vector.extract_strided_slice %10 {offsets = [0, 16], sizes = [8, 16], strides = [1, 1]} : vector<8x32xbf16> to vector<8x16xbf16>
    %c1 = arith.constant 1 : index
    %c0_33 = arith.constant 0 : index
    %c0_34 = arith.constant 0 : index
    %50 = vector.load %arg11[%c1, %c0_33, %c0_34] : memref<2x8x16xbf16, #tpu.memory_space<vmem>>, vector<1x8x16xbf16>
    %51 = vector.shape_cast %50 : vector<1x8x16xbf16> to vector<8x16xbf16>
    %cst_35 = arith.constant dense<0.000000e+00> : vector<8x8xf32>
    %52 = tpu.matmul %51, %48, %cst_35 {dimension_numbers = #tpu.dot_dimension_numbers<[1], [1], [0], [0], [0, 0, 1, 0], [], []>} : vector<8x16xbf16>, vector<8x16xbf16>, vector<8x8xf32> -> vector<8x8xf32>
    %c1_36 = arith.constant 1 : index
    %c0_37 = arith.constant 0 : index
    %c0_38 = arith.constant 0 : index
    %53 = vector.load %arg12[%c1_36, %c0_37, %c0_38] : memref<2x8x1xf32, #tpu.memory_space<vmem>>, vector<1x8x1xf32>
    %54 = vector.shape_cast %53 : vector<1x8x1xf32> to vector<8x1xf32>
    %cst_39 = arith.constant dense<0xFF800000> : vector<8xf32>
    %55 = vector.multi_reduction <maximumf>, %52, %cst_39 [1] : vector<8x8xf32> to vector<8xf32>
    %56 = vector.shape_cast %55 : vector<8xf32> to vector<8x1xf32>
    %57 = arith.maximumf %54, %56 : vector<8x1xf32>
    %58 = arith.subf %54, %57 : vector<8x1xf32>
    %59 = math.exp %58 : vector<8x1xf32>
    %60 = vector.broadcast %57 : vector<8x1xf32> to vector<8x8xf32>
    %61 = arith.subf %52, %60 : vector<8x8xf32>
    %62 = math.exp %61 : vector<8x8xf32>
    %c1_40 = arith.constant 1 : index
    %c0_41 = arith.constant 0 : index
    %c0_42 = arith.constant 0 : index
    %63 = vector.load %arg13[%c1_40, %c0_41, %c0_42] : memref<2x8x1xf32, #tpu.memory_space<vmem>>, vector<1x8x1xf32>
    %64 = vector.shape_cast %63 : vector<1x8x1xf32> to vector<8x1xf32>
    %65 = arith.mulf %59, %64 : vector<8x1xf32>
    %cst_43 = arith.constant dense<0.000000e+00> : vector<8xf32>
    %66 = vector.multi_reduction <add>, %62, %cst_43 [1] : vector<8x8xf32> to vector<8xf32>
    %67 = vector.shape_cast %66 : vector<8xf32> to vector<8x1xf32>
    %68 = arith.addf %65, %67 : vector<8x1xf32>
    %c1_44 = arith.constant 1 : index
    %c0_45 = arith.constant 0 : index
    %c0_46 = arith.constant 0 : index
    %69 = vector.load %arg13[%c1_44, %c0_45, %c0_46] : memref<2x8x1xf32, #tpu.memory_space<vmem>>, vector<1x8x1xf32>
    %70 = vector.shape_cast %69 : vector<1x8x1xf32> to vector<8x1xf32>
    %71 = vector.shape_cast %68 : vector<8x1xf32> to vector<1x8x1xf32>
    tpu.vector_store %arg13[%c1_44, %c0_45, %c0_46], %71 {strides = array<i32>} : memref<2x8x1xf32, #tpu.memory_space<vmem>>, vector<1x8x1xf32>,
    %c1_47 = arith.constant 1 : index
    %c0_48 = arith.constant 0 : index
    %c0_49 = arith.constant 0 : index
    %72 = vector.load %arg14[%c1_47, %c0_48, %c0_49] : memref<2x8x16xf32, #tpu.memory_space<vmem>>, vector<1x8x16xf32>
    %73 = vector.shape_cast %72 : vector<1x8x16xf32> to vector<8x16xf32>
    %74 = vector.broadcast %59 : vector<8x1xf32> to vector<8x16xf32>
    %75 = arith.mulf %74, %73 : vector<8x16xf32>
    %76 = arith.truncf %62 : vector<8x8xf32> to vector<8x8xbf16>
    %cst_50 = arith.constant dense<0.000000e+00> : vector<8x16xf32>
    %77 = tpu.matmul %76, %49, %cst_50 {dimension_numbers = #tpu.dot_dimension_numbers<[1], [0], [0], [1], [0, 0, 1, 1], [], []>} : vector<8x8xbf16>, vector<8x16xbf16>, vector<8x16xf32> -> vector<8x16xf32>
    %78 = arith.addf %75, %77 : vector<8x16xf32>
    %c1_51 = arith.constant 1 : index
    %c0_52 = arith.constant 0 : index
    %c0_53 = arith.constant 0 : index
    %79 = vector.load %arg14[%c1_51, %c0_52, %c0_53] : memref<2x8x16xf32, #tpu.memory_space<vmem>>, vector<1x8x16xf32>
    %80 = vector.shape_cast %79 : vector<1x8x16xf32> to vector<8x16xf32>
    %81 = vector.shape_cast %78 : vector<8x16xf32> to vector<1x8x16xf32>
    tpu.vector_store %arg14[%c1_51, %c0_52, %c0_53], %81 {strides = array<i32>} : memref<2x8x16xf32, #tpu.memory_space<vmem>>, vector<1x8x16xf32>,
    %c1_54 = arith.constant 1 : index
    %c0_55 = arith.constant 0 : index
    %c0_56 = arith.constant 0 : index
    %82 = vector.load %arg12[%c1_54, %c0_55, %c0_56] : memref<2x8x1xf32, #tpu.memory_space<vmem>>, vector<1x8x1xf32>
    %83 = vector.shape_cast %82 : vector<1x8x1xf32> to vector<8x1xf32>
    %84 = vector.shape_cast %57 : vector<8x1xf32> to vector<1x8x1xf32>
    tpu.vector_store %arg12[%c1_54, %c0_55, %c0_56], %84 {strides = array<i32>} : memref<2x8x1xf32, #tpu.memory_space<vmem>>, vector<1x8x1xf32>,
    %c1_i32 = arith.constant 1 : i32
    %85 = arith.cmpi eq, %arg2, %c1_i32 : i32
    %86 = arith.extui %85 : i1 to i32
    %c0_i32_57 = arith.constant 0 : i32
    %87 = arith.cmpi ne, %86, %c0_i32_57 : i32
    scf.if %87 {
      %c0_58 = arith.constant 0 : index
      %c0_59 = arith.constant 0 : index
      %c0_60 = arith.constant 0 : index
      %88 = vector.load %arg13[%c0_58, %c0_59, %c0_60] : memref<2x8x1xf32, #tpu.memory_space<vmem>>, vector<2x8x1xf32>
      %89 = tpu.reciprocal %88 {approx = true} : vector<2x8x1xf32> -> vector<2x8x1xf32>
      %c0_61 = arith.constant 0 : index
      %c0_62 = arith.constant 0 : index
      %c0_63 = arith.constant 0 : index
      %90 = vector.load %arg14[%c0_61, %c0_62, %c0_63] : memref<2x8x16xf32, #tpu.memory_space<vmem>>, vector<1x8x16xf32>
      %91 = vector.shape_cast %90 : vector<1x8x16xf32> to vector<8x16xf32>
      %92 = vector.extract_strided_slice %89 {offsets = [0, 0, 0], sizes = [1, 8, 1], strides = [1, 1, 1]} : vector<2x8x1xf32> to vector<1x8x1xf32>
      %93 = vector.shape_cast %92 : vector<1x8x1xf32> to vector<8x1xf32>
      %94 = vector.broadcast %93 : vector<8x1xf32> to vector<8x16xf32>
      %95 = arith.mulf %91, %94 : vector<8x16xf32>
      %96 = arith.truncf %95 : vector<8x16xf32> to vector<8x16xbf16>
      %c0_64 = arith.constant 0 : index
      %c0_65 = arith.constant 0 : index
      %c0_66 = arith.constant 0 : index
      %97 = vector.load %arg8[%c0_64, %c0_65, %c0_66] : memref<2x16x32xbf16, #tpu.memory_space<vmem>>, vector<1x16x32xbf16>
      %98 = vector.shape_cast %97 : vector<1x16x32xbf16> to vector<16x32xbf16>
      %cst_67 = arith.constant dense<0.000000e+00> : vector<8x32xf32>
      %99 = tpu.matmul %96, %98, %cst_67 {dimension_numbers = #tpu.dot_dimension_numbers<[1], [0], [0], [1], [0, 0, 1, 1], [], []>} : vector<8x16xbf16>, vector<16x32xbf16>, vector<8x32xf32> -> vector<8x32xf32>
      %c1_68 = arith.constant 1 : index
      %c0_69 = arith.constant 0 : index
      %c0_70 = arith.constant 0 : index
      %100 = vector.load %arg14[%c1_68, %c0_69, %c0_70] : memref<2x8x16xf32, #tpu.memory_space<vmem>>, vector<1x8x16xf32>
      %101 = vector.shape_cast %100 : vector<1x8x16xf32> to vector<8x16xf32>
      %102 = vector.extract_strided_slice %89 {offsets = [1, 0, 0], sizes = [1, 8, 1], strides = [1, 1, 1]} : vector<2x8x1xf32> to vector<1x8x1xf32>
      %103 = vector.shape_cast %102 : vector<1x8x1xf32> to vector<8x1xf32>
      %104 = vector.broadcast %103 : vector<8x1xf32> to vector<8x16xf32>
      %105 = arith.mulf %101, %104 : vector<8x16xf32>
      %106 = arith.truncf %105 : vector<8x16xf32> to vector<8x16xbf16>
      %c1_71 = arith.constant 1 : index
      %c0_72 = arith.constant 0 : index
      %c0_73 = arith.constant 0 : index
      %107 = vector.load %arg8[%c1_71, %c0_72, %c0_73] : memref<2x16x32xbf16, #tpu.memory_space<vmem>>, vector<1x16x32xbf16>
      %108 = vector.shape_cast %107 : vector<1x16x32xbf16> to vector<16x32xbf16>
      %cst_74 = arith.constant dense<0.000000e+00> : vector<8x32xf32>
      %109 = tpu.matmul %106, %108, %cst_74 {dimension_numbers = #tpu.dot_dimension_numbers<[1], [0], [0], [1], [0, 0, 1, 1], [], []>} : vector<8x16xbf16>, vector<16x32xbf16>, vector<8x32xf32> -> vector<8x32xf32>
      %110 = arith.addf %99, %109 : vector<8x32xf32>
      %c0_75 = arith.constant 0 : index
      %c0_76 = arith.constant 0 : index
      %111 = vector.load %arg9[%c0_75, %c0_76] : memref<1x32xf32, #tpu.memory_space<vmem>>, vector<1x32xf32>
      %112 = vector.broadcast %111 : vector<1x32xf32> to vector<8x32xf32>
      %113 = arith.addf %110, %112 : vector<8x32xf32>
      %c0_77 = arith.constant 0 : index
      %c0_78 = arith.constant 0 : index
      %c0_79 = arith.constant 0 : index
      %114 = vector.load %arg10[%c0_77, %c0_78, %c0_79] : memref<1x8x32xf32, #tpu.memory_space<vmem>>, vector<1x8x32xf32>
      %115 = vector.shape_cast %114 : vector<1x8x32xf32> to vector<8x32xf32>
      %116 = vector.shape_cast %113 : vector<8x32xf32> to vector<1x8x32xf32>
      tpu.vector_store %arg10[%c0_77, %c0_78, %c0_79], %116 {strides = array<i32>} : memref<1x8x32xf32, #tpu.memory_space<vmem>>, vector<1x8x32xf32>,
    } else {
    }
    return
  }
  func.func @transform_0(%arg0: i32, %arg1: i32, %arg2: i32) -> (i32, i32, i32) {
    %c0_i32 = arith.constant 0 : i32
    %c0_i32_0 = arith.constant 0 : i32
    return %arg0, %arg1, %c0_i32 : i32, i32, i32
  }
  func.func @transform_1(%arg0: i32, %arg1: i32, %arg2: i32) -> (i32, i32, i32) {
    %c0_i32 = arith.constant 0 : i32
    %c0_i32_0 = arith.constant 0 : i32
    return %arg0, %arg2, %c0_i32 : i32, i32, i32
  }
  func.func @transform_2(%arg0: i32, %arg1: i32, %arg2: i32) -> (i32, i32) {
    %c0_i32 = arith.constant 0 : i32
    %c0_i32_0 = arith.constant 0 : i32
    %c0_i32_1 = arith.constant 0 : i32
    return %c0_i32, %c0_i32_0 : i32, i32
  }
  func.func @transform_3(%arg0: i32, %arg1: i32, %arg2: i32) -> (i32, i32) {
    %c0_i32 = arith.constant 0 : i32
    %c0_i32_0 = arith.constant 0 : i32
    %c0_i32_1 = arith.constant 0 : i32
    return %c0_i32, %c0_i32_0 : i32, i32
  }
  func.func @transform_4(%arg0: i32, %arg1: i32, %arg2: i32) -> (i32, i32) {
    %c0_i32 = arith.constant 0 : i32
    %c0_i32_0 = arith.constant 0 : i32
    %c0_i32_1 = arith.constant 0 : i32
    return %c0_i32, %c0_i32_0 : i32, i32
  }
  func.func @transform_5(%arg0: i32, %arg1: i32, %arg2: i32) -> (i32, i32, i32) {
    %c0_i32 = arith.constant 0 : i32
    %c0_i32_0 = arith.constant 0 : i32
    %c0_i32_1 = arith.constant 0 : i32
    %c0_i32_2 = arith.constant 0 : i32
    return %c0_i32, %c0_i32_0, %c0_i32_1 : i32, i32, i32
  }
  func.func @transform_6(%arg0: i32, %arg1: i32, %arg2: i32) -> (i32, i32) {
    %c0_i32 = arith.constant 0 : i32
    %c0_i32_0 = arith.constant 0 : i32
    %c0_i32_1 = arith.constant 0 : i32
    return %c0_i32, %c0_i32_0 : i32, i32
  }
  func.func @transform_7(%arg0: i32, %arg1: i32, %arg2: i32) -> (i32, i32, i32) {
    %c0_i32 = arith.constant 0 : i32
    %c0_i32_0 = arith.constant 0 : i32
    return %arg0, %arg1, %c0_i32 : i32, i32, i32
  }
}

</mosaic_0001>

<llo_original>
// kernel: tpu_custom_call.1
$region0: #{tpu_custom_call.1}
  #allocation0 [shape = 'u32[]', space=smem, size = 0x4, offset = 0x4, fixed_abs, tag = 'smem constant byte address 0x4 - core index']
  #allocation1 [shape = 'u32[144,128]{1,0:T(1,128)}', space=vmem, size = 0x12000, scoped, tag = 'internal scratch']
  #allocation2 [shape = 'bf16[2,8,16]{2,1,0:T(8,128)(2,1)}', space=vmem, size = 0x1000, scoped, tag = 'scratch operand']
  #allocation3 [shape = 'f32[2,8,1]{2,1,0:T(8,128)}', space=vmem, size = 0x2000, scoped, tag = 'scratch operand']
  #allocation4 [shape = 'f32[2,8,1]{2,1,0:T(8,128)}', space=vmem, size = 0x2000, scoped, tag = 'scratch operand']
  #allocation5 [shape = 'f32[2,8,16]{2,1,0:T(8,128)}', space=vmem, size = 0x2000, scoped, tag = 'scratch operand']
  %s0 = inlined_call_operand.hbm [shape: bf16[2,16,32], index: 0, kind: input, shape index: {}]
  %s1 = inlined_call_operand.hbm [shape: bf16[2,16,32], index: 1, kind: input, shape index: {}]
  %s2 = inlined_call_operand.hbm [shape: bf16[32,32], index: 2, kind: input, shape index: {}]
  %s3 = inlined_call_operand.hbm [shape: bf16[32,32], index: 3, kind: input, shape index: {}]
  %s4 = inlined_call_operand.hbm [shape: bf16[32,32], index: 4, kind: input, shape index: {}]
  %s5 = inlined_call_operand.hbm [shape: bf16[2,16,32], index: 5, kind: input, shape index: {}]
  %s6 = inlined_call_operand.hbm [shape: f32[1,32], index: 6, kind: input, shape index: {}]
  %s7 = inlined_call_operand.hbm [shape: f32[2,16,32], index: 7, kind: output, shape index: {}]
  %s8 = sld [smem:[#allocation0]]
  $region97: #{tpu_custom_call.1} parent=0
    _
  %s10 = ssub.s32 1, %s8
  %s11 = scalar_select 0, %s10, %s8
  $region1: #{tpu_custom_call.1} parent=0
    #allocation6 [shape = 'u8[4096]{0}', space=vmem, size = 0x1000, scoped, tag = 'input window, operand 0']
    #allocation7 [shape = 's32[2]{0}', space=sflag, size = 0x8, scoped, tag = 'scoped memory for tpu_custom_call.1']
    #allocation8 [shape = 's32[2]{0}', space=sflag, size = 0x8, scoped, tag = 'scoped memory for tpu_custom_call.1']
    #allocation9 [shape = 'u8[4096]{0}', space=vmem, size = 0x1000, scoped, tag = 'input window, operand 1']
    #allocation10 [shape = 's32[2]{0}', space=sflag, size = 0x8, scoped, tag = 'scoped memory for tpu_custom_call.1']
    #allocation11 [shape = 'u8[8192]{0}', space=vmem, size = 0x2000, scoped, tag = 'input window, operand 2, single buffered']
    #allocation12 [shape = 'u8[8192]{0}', space=vmem, size = 0x2000, scoped, tag = 'input window, operand 3, single buffered']
    #allocation13 [shape = 's32[1]{0}', space=sflag, size = 0x4, scoped, tag = 'scoped memory for tpu_custom_call.1']
    #allocation14 [shape = 'u8[8192]{0}', space=vmem, size = 0x2000, scoped, tag = 'input window, operand 4, single buffered']
    #allocation15 [shape = 'u8[8192]{0}', space=vmem, size = 0x2000, scoped, tag = 'input window, operand 5, single buffered']
    #allocation16 [shape = 's32[1]{0}', space=sflag, size = 0x4, scoped, tag = 'scoped memory for tpu_custom_call.1']
    #allocation17 [shape = 'u8[512]{0}', space=vmem, size = 0x400, scoped, tag = 'input window, operand 6, single buffered']
    #allocation18 [shape = 'u8[8192]{0}', space=vmem, size = 0x2000, scoped, tag = 'output window, operand 0']
    %12 = vsyncpa [#allocation7], 0
    %s13 = scalar_lea.sflag [#allocation7], 1
    %14 = vsyncpa %s13, 0
    %15 = vsyncpa [#allocation10], 0
    %s16 = scalar_lea.sflag [#allocation10], 1
    %17 = vsyncpa %s16, 0
    %18 = vsyncpa [#allocation13], 0
    %19 = vsyncpa [#allocation16], 0
    %20 = vsyncpa [#allocation8], 0
    %s21 = scalar_lea.sflag [#allocation8], 1
    %22 = vsyncpa %s21, 0
    loop: start=0, step=1, limit=10
    $region2: #{tpu_custom_call.1} parent=1 // loop_pre_header
      _
    $region3: #{tpu_custom_call.1} parent=1 // loop_header
      %s24 = sphi 0, %s28
      %p25 = scmp.ge.s32.totalorder %s24, 10
      %s31 = sphi 0, %s50
      %s32 = sphi 0, %s46
      %s33 = sphi 0, %s42
      %s34 = sphi 0, %s31
      %s35 = sphi 0, %s32
      %s36 = sphi 0, %s33
      %s37 = sphi 0, %s34
      %s38 = sphi 0, %s35
      %s39 = sphi 0, %s36
      %s55 = sphi 0, %s57
      %s58 = sphi 0, %s55
      %s59 = sphi 0, %s58
      %s75 = sphi 0, %s59
      %s83 = sphi 0, %s85
      %s86 = sphi 0, %s83
      %s87 = sphi 0, %s86
      %s103 = sphi 0, %s87
      %s107 = sphi 0, %s107
      %s109 = sphi 0, %s107
      %s110 = sphi 0, %s109
      %s124 = sphi 0, %s110
      %s128 = sphi 0, %s128
      %s130 = sphi 0, %s128
      %s131 = sphi 0, %s130
      %s145 = sphi 0, %s131
      %s149 = sphi 0, %s149
      %s151 = sphi 0, %s149
      %s152 = sphi 0, %s151
      %s166 = sphi 0, %s152
      %s170 = sphi 0, %s170
      %s172 = sphi 0, %s170
      %s173 = sphi 0, %s172
      %s187 = sphi 0, %s173
      %s191 = sphi 0, %s191
      %s193 = sphi 0, %s191
      %s194 = sphi 0, %s193
      %s208 = sphi 0, %s194
      %s216 = sphi 0, %s218
      %s219 = sphi 0, %s216
      %s220 = sphi 0, %s219
      %s236 = sphi 0, %s220
    $region4: #{tpu_custom_call.1} parent=1 // loop_header_branch
      %27 = sbr.rel (%p25) target = $region8
    $region5: #{tpu_custom_call.1} parent=1 // loop_body
      %s29 = ssub.s32 %s24, 1
      %s30 = ssub.s32 %s24, 2
      %s40 = sadd.s32 1, %s33
      %p41 = scmp.ge.s32.totalorder %s40, 2
      %s42 = scalar_select %p41, 0, %s40
      %s43 = sadd.s32 1, %s32
      %s44 = scalar_select %p41, %s43, %s32
      %p45 = scmp.ge.s32.totalorder %s44, 2
      %s46 = scalar_select %p45, 0, %s44
      %s47 = sadd.s32 1, %s31
      %s48 = scalar_select %p45, %s47, %s31
      %p49 = scmp.ge.s32.totalorder %s48, 2
      %s50 = scalar_select %p49, 0, %s48
      %s51 = ssub.s32 %s31, %s50
      %s52 = ssub.s32 %s32, %s46
      %s53 = sor.u32 %s51, %s52
      %p54 = scmp.eq.s32.totalorder %s53, 0
      %s56 = sadd.s32 %s55, 1
      %s57 = scalar_select %p54, %s55, %s56
      %p60 = pneg %p54
      %p61 = scmp.eq.s32.totalorder %s24, 7
      %p62 = por %p60, %p61
      %p63 = scmp.ne.s32.totalorder %s55, %s58
      %p64 = scmp.eq.s32.totalorder %s24, 0
      %p65 = por %p63, %p64
      %p66 = scmp.ne.s32.totalorder %s55, %s58
      %p67 = scmp.eq.s32.totalorder %s29, 7
      %p68 = por %p66, %p67
      %p69 = scmp.ne.s32.totalorder %s58, %s59
      %p70 = scmp.eq.s32.totalorder %s29, 0
      %p71 = por %p69, %p70
      %p72 = scmp.ne.s32.totalorder %s58, %s59
      %p73 = scmp.eq.s32.totalorder %s30, 7
      %p74 = por %p72, %p73
      %p76 = scmp.ne.s32.totalorder %s59, %s75
      %p77 = scmp.eq.s32.totalorder %s30, 0
      %p78 = por %p76, %p77
      %s79 = ssub.s32 %s31, %s50
      %s80 = ssub.s32 %s33, %s42
      %s81 = sor.u32 %s79, %s80
      %p82 = scmp.eq.s32.totalorder %s81, 0
      %s84 = sadd.s32 %s83, 1
      %s85 = scalar_select %p82, %s83, %s84
      %p88 = pneg %p82
      %p89 = scmp.eq.s32.totalorder %s24, 7
      %p90 = por %p88, %p89
      %p91 = scmp.ne.s32.totalorder %s83, %s86
      %p92 = scmp.eq.s32.totalorder %s24, 0
      %p93 = por %p91, %p92
      %p94 = scmp.ne.s32.totalorder %s83, %s86
      %p95 = scmp.eq.s32.totalorder %s29, 7
      %p96 = por %p94, %p95
      %p97 = scmp.ne.s32.totalorder %s86, %s87
      %p98 = scmp.eq.s32.totalorder %s29, 0
      %p99 = por %p97, %p98
      %p100 = scmp.ne.s32.totalorder %s86, %s87
      %p101 = scmp.eq.s32.totalorder %s30, 7
      %p102 = por %p100, %p101
      %p104 = scmp.ne.s32.totalorder %s87, %s103
      %p105 = scmp.eq.s32.totalorder %s30, 0
      %p106 = por %p104, %p105
      %s108 = sadd.s32 %s107, 1
      %p111 = scmp.eq.s32.totalorder %s24, 7
      %p112 = scmp.ne.s32.totalorder %s107, %s109
      %p113 = scmp.eq.s32.totalorder %s24, 0
      %p114 = por %p112, %p113
      %p115 = scmp.ne.s32.totalorder %s107, %s109
      %p116 = scmp.eq.s32.totalorder %s29, 7
      %p117 = por %p115, %p116
      %p118 = scmp.ne.s32.totalorder %s109, %s110
      %p119 = scmp.eq.s32.totalorder %s29, 0
      %p120 = por %p118, %p119
      %p121 = scmp.ne.s32.totalorder %s109, %s110
      %p122 = scmp.eq.s32.totalorder %s30, 7
      %p123 = por %p121, %p122
      %p125 = scmp.ne.s32.totalorder %s110, %s124
      %p126 = scmp.eq.s32.totalorder %s30, 0
      %p127 = por %p125, %p126
      %s129 = sadd.s32 %s128, 1
      %p132 = scmp.eq.s32.totalorder %s24, 7
      %p133 = scmp.ne.s32.totalorder %s128, %s130
      %p134 = scmp.eq.s32.totalorder %s24, 0
      %p135 = por %p133, %p134
      %p136 = scmp.ne.s32.totalorder %s128, %s130
      %p137 = scmp.eq.s32.totalorder %s29, 7
      %p138 = por %p136, %p137
      %p139 = scmp.ne.s32.totalorder %s130, %s131
      %p140 = scmp.eq.s32.totalorder %s29, 0
      %p141 = por %p139, %p140
      %p142 = scmp.ne.s32.totalorder %s130, %s131
      %p143 = scmp.eq.s32.totalorder %s30, 7
      %p144 = por %p142, %p143
      %p146 = scmp.ne.s32.totalorder %s131, %s145
      %p147 = scmp.eq.s32.totalorder %s30, 0
      %p148 = por %p146, %p147
      %s150 = sadd.s32 %s149, 1
      %p153 = scmp.eq.s32.totalorder %s24, 7
      %p154 = scmp.ne.s32.totalorder %s149, %s151
      %p155 = scmp.eq.s32.totalorder %s24, 0
      %p156 = por %p154, %p155
      %p157 = scmp.ne.s32.totalorder %s149, %s151
      %p158 = scmp.eq.s32.totalorder %s29, 7
      %p159 = por %p157, %p158
      %p160 = scmp.ne.s32.totalorder %s151, %s152
      %p161 = scmp.eq.s32.totalorder %s29, 0
      %p162 = por %p160, %p161
      %p163 = scmp.ne.s32.totalorder %s151, %s152
      %p164 = scmp.eq.s32.totalorder %s30, 7
      %p165 = por %p163, %p164
      %p167 = scmp.ne.s32.totalorder %s152, %s166
      %p168 = scmp.eq.s32.totalorder %s30, 0
      %p169 = por %p167, %p168
      %s171 = sadd.s32 %s170, 1
      %p174 = scmp.eq.s32.totalorder %s24, 7
      %p175 = scmp.ne.s32.totalorder %s170, %s172
      %p176 = scmp.eq.s32.totalorder %s24, 0
      %p177 = por %p175, %p176
      %p178 = scmp.ne.s32.totalorder %s170, %s172
      %p179 = scmp.eq.s32.totalorder %s29, 7
      %p180 = por %p178, %p179
      %p181 = scmp.ne.s32.totalorder %s172, %s173
      %p182 = scmp.eq.s32.totalorder %s29, 0
      %p183 = por %p181, %p182
      %p184 = scmp.ne.s32.totalorder %s172, %s173
      %p185 = scmp.eq.s32.totalorder %s30, 7
      %p186 = por %p184, %p185
      %p188 = scmp.ne.s32.totalorder %s173, %s187
      %p189 = scmp.eq.s32.totalorder %s30, 0
      %p190 = por %p188, %p189
      %s192 = sadd.s32 %s191, 1
      %p195 = scmp.eq.s32.totalorder %s24, 7
      %p196 = scmp.ne.s32.totalorder %s191, %s193
      %p197 = scmp.eq.s32.totalorder %s24, 0
      %p198 = por %p196, %p197
      %p199 = scmp.ne.s32.totalorder %s191, %s193
      %p200 = scmp.eq.s32.totalorder %s29, 7
      %p201 = por %p199, %p200
      %p202 = scmp.ne.s32.totalorder %s193, %s194
      %p203 = scmp.eq.s32.totalorder %s29, 0
      %p204 = por %p202, %p203
      %p205 = scmp.ne.s32.totalorder %s193, %s194
      %p206 = scmp.eq.s32.totalorder %s30, 7
      %p207 = por %p205, %p206
      %p209 = scmp.ne.s32.totalorder %s194, %s208
      %p210 = scmp.eq.s32.totalorder %s30, 0
      %p211 = por %p209, %p210
      %s212 = ssub.s32 %s31, %s50
      %s213 = ssub.s32 %s32, %s46
      %s214 = sor.u32 %s212, %s213
      %p215 = scmp.eq.s32.totalorder %s214, 0
      %s217 = sadd.s32 %s216, 1
      %s218 = scalar_select %p215, %s216, %s217
      %p221 = pneg %p215
      %p222 = scmp.eq.s32.totalorder %s24, 7
      %p223 = por %p221, %p222
      %p224 = scmp.ne.s32.totalorder %s216, %s219
      %p225 = scmp.eq.s32.totalorder %s24, 0
      %p226 = por %p224, %p225
      %p227 = scmp.ne.s32.totalorder %s216, %s219
      %p228 = scmp.eq.s32.totalorder %s29, 7
      %p229 = por %p227, %p228
      %p230 = scmp.ne.s32.totalorder %s219, %s220
      %p231 = scmp.eq.s32.totalorder %s29, 0
      %p232 = por %p230, %p231
      %p233 = scmp.ne.s32.totalorder %s219, %s220
      %p234 = scmp.eq.s32.totalorder %s30, 7
      %p235 = por %p233, %p234
      %p237 = scmp.ne.s32.totalorder %s220, %s236
      %p238 = scmp.eq.s32.totalorder %s30, 0
      %p239 = por %p237, %p238
      %p240 = scmp.le.s32.totalorder 1, %s24
      %p241 = scmp.lt.s32.totalorder %s24, 9
      %p242 = pnand %p240, %p241
      %p243 = pneg %p242
      // Predicated region
      $region9: #{tpu_custom_call.1} parent=5 // pred_check
        _
      $region10: #{tpu_custom_call.1} parent=5 // pred_check_branch
        %245 = sbr.rel (%p242) target = $region12
      $region11: #{tpu_custom_call.1} parent=5 // pred_region
        %s246 = ssub.s32 %s24, 1
        // Predicated region
        $region13: #{tpu_custom_call.1} parent=11 // pred_check
          %p247 = pneg %p120
        $region14: #{tpu_custom_call.1} parent=11 // pred_check_branch
          %249 = sbr.rel (%p247) target = $region16
        $region15: #{tpu_custom_call.1} parent=11 // pred_region
          %s251 = ssub.s32 256, 256
          %252 = vsyncadd [#allocation10], %s251
          %s253 = sshll.u32 [#allocation11], 4
          %s254 = int_to_ptr.vmem [resolvable:$true] %s253
          %259 = dma.hbm_to_vmem [thread:$0]  %s2, 256, %s254, [#allocation10], 64, 64, 4
        $region16: #{tpu_custom_call.1} parent=11 // pred_fallthru
          _
        // Predicated region
        $region17: #{tpu_custom_call.1} parent=11 // pred_check
          %p260 = pneg %p141
        $region18: #{tpu_custom_call.1} parent=11 // pred_check_branch
          %262 = sbr.rel (%p260) target = $region20
        $region19: #{tpu_custom_call.1} parent=11 // pred_region
          %s264 = ssub.s32 256, 256
          %265 = vsyncadd [#allocation13], %s264
          %s266 = sshll.u32 [#allocation12], 4
          %s267 = int_to_ptr.vmem [resolvable:$true] %s266
          %272 = dma.hbm_to_vmem [thread:$0]  %s3, 256, %s267, [#allocation13], 64, 64, 4
        $region20: #{tpu_custom_call.1} parent=11 // pred_fallthru
          _
        // Predicated region
        $region21: #{tpu_custom_call.1} parent=11 // pred_check
          %p273 = pneg %p162
        $region22: #{tpu_custom_call.1} parent=11 // pred_check_branch
          %275 = sbr.rel (%p273) target = $region24
        $region23: #{tpu_custom_call.1} parent=11 // pred_region
          %s277 = ssub.s32 256, 256
          %278 = vsyncadd [#allocation13], %s277
          %s279 = sshll.u32 [#allocation14], 4
          %s280 = int_to_ptr.vmem [resolvable:$true] %s279
          %285 = dma.hbm_to_vmem [thread:$0]  %s4, 256, %s280, [#allocation13], 64, 64, 4
        $region24: #{tpu_custom_call.1} parent=11 // pred_fallthru
          _
        // Predicated region
        $region25: #{tpu_custom_call.1} parent=11 // pred_check
          %p286 = pneg %p183
        $region26: #{tpu_custom_call.1} parent=11 // pred_check_branch
          %288 = sbr.rel (%p286) target = $region28
        $region27: #{tpu_custom_call.1} parent=11 // pred_region
          %s290 = ssub.s32 256, 256
          %291 = vsyncadd [#allocation16], %s290
          %s292 = sshll.u32 [#allocation15], 4
          %s293 = int_to_ptr.vmem [resolvable:$true] %s292
          %298 = dma.hbm_to_vmem [thread:$0]  %s5, 256, %s293, [#allocation16], 64, 64, 4
        $region28: #{tpu_custom_call.1} parent=11 // pred_fallthru
          _
        // Predicated region
        $region29: #{tpu_custom_call.1} parent=11 // pred_check
          %p299 = pneg %p204
        $region30: #{tpu_custom_call.1} parent=11 // pred_check_branch
          %301 = sbr.rel (%p299) target = $region32
        $region31: #{tpu_custom_call.1} parent=11 // pred_region
          %s303 = ssub.s32 16, 16
          %304 = vsyncadd [#allocation16], %s303
          %s306 = sshll.u32 [#allocation17], 4
          %s307 = int_to_ptr.vmem [resolvable:$true] %s306
          %309 = dma.hbm_to_vmem [thread:$0]  %s6, 16, %s307, [#allocation16]
        $region32: #{tpu_custom_call.1} parent=11 // pred_fallthru
          _
      $region12: #{tpu_custom_call.1} parent=5 // pred_fallthru
        _
      %p310 = scmp.lt.s32.totalorder %s24, 8
      // Predicated region
      $region33: #{tpu_custom_call.1} parent=5 // pred_check
        %p311 = pneg %p310
      $region34: #{tpu_custom_call.1} parent=5 // pred_check_branch
        %313 = sbr.rel (%p311) target = $region36
      $region35: #{tpu_custom_call.1} parent=5 // pred_region
        // Predicated region
        $region37: #{tpu_custom_call.1} parent=35 // pred_check
          %p314 = pneg %p65
        $region38: #{tpu_custom_call.1} parent=35 // pred_check_branch
          %316 = sbr.rel (%p314) target = $region40
        $region39: #{tpu_custom_call.1} parent=35 // pred_region
          %s317 = sand.u32 %s55, 1
          %s318 = scalar_lea.sflag [#allocation7], %s317
          %s319 = sand.u32 %s55, 1
          %s320 = smul.addr %s319, 4
          %s321 = scalar_lea.vmem [#allocation6], %s320
          %s323 = ssub.s32 64, 64
          %324 = vsyncadd %s318, %s323
          %s325 = smul.addr %s31, 2
          %s326 = sadd.s32 %s32, %s325
          %s327 = smul.addr %s326, 64
          %s328 = scalar_lea.hbm %s0, %s327
          %s330 = sshll.u32 %s321, 4
          %s331 = int_to_ptr.vmem [resolvable:$true] %s330
          %333 = dma.hbm_to_vmem [thread:$0]  %s328, 64, %s331, %s318
        $region40: #{tpu_custom_call.1} parent=35 // pred_fallthru
          _
        // Predicated region
        $region41: #{tpu_custom_call.1} parent=35 // pred_check
          %p334 = pneg %p93
        $region42: #{tpu_custom_call.1} parent=35 // pred_check_branch
          %336 = sbr.rel (%p334) target = $region44
        $region43: #{tpu_custom_call.1} parent=35 // pred_region
          %s337 = sand.u32 %s24, 1
          %s338 = scalar_lea.sflag [#allocation10], %s337
          %s339 = sand.u32 %s83, 1
          %s340 = smul.addr %s339, 4
          %s341 = scalar_lea.vmem [#allocation9], %s340
          %s343 = ssub.s32 64, 64
          %344 = vsyncadd %s338, %s343
          %s345 = smul.addr %s31, 2
          %s346 = sadd.s32 %s33, %s345
          %s347 = smul.addr %s346, 64
          %s348 = scalar_lea.hbm %s1, %s347
          %s350 = sshll.u32 %s341, 4
          %s351 = int_to_ptr.vmem [resolvable:$true] %s350
          %353 = dma.hbm_to_vmem [thread:$0]  %s348, 64, %s351, %s338
        $region44: #{tpu_custom_call.1} parent=35 // pred_fallthru
          _
      $region36: #{tpu_custom_call.1} parent=5 // pred_fallthru
        _
      %p354 = scmp.le.s32.totalorder 1, %s24
      %p355 = scmp.lt.s32.totalorder %s24, 9
      %p356 = pnand %p354, %p355
      %p357 = pneg %p356
      // Predicated region
      $region45: #{tpu_custom_call.1} parent=5 // pred_check
        _
      $region46: #{tpu_custom_call.1} parent=5 // pred_check_branch
        %359 = sbr.rel (%p356) target = $region48
      $region47: #{tpu_custom_call.1} parent=5 // pred_region
        %s360 = ssub.s32 %s24, 1
        %s361 = sand.u32 %s58, 1
        %s362 = scalar_lea.sflag [#allocation7], %s361
        %s363 = sand.u32 %s58, 1
        %s364 = smul.addr %s363, 4
        %s365 = scalar_lea.vmem [#allocation6], %s364
        // Predicated region
        $region49: #{tpu_custom_call.1} parent=47 // pred_check
          %p366 = pneg %p71
        $region50: #{tpu_custom_call.1} parent=47 // pred_check_branch
          %368 = sbr.rel (%p366) target = $region52
        $region51: #{tpu_custom_call.1} parent=47 // pred_region
          %369 = dma.done %s362, 64
        $region52: #{tpu_custom_call.1} parent=47 // pred_fallthru
          _
        %s370 = sand.u32 %s29, 1
        %s371 = scalar_lea.sflag [#allocation10], %s370
        %s372 = sand.u32 %s86, 1
        %s373 = smul.addr %s372, 4
        %s374 = scalar_lea.vmem [#allocation9], %s373
        // Predicated region
        $region53: #{tpu_custom_call.1} parent=47 // pred_check
          %p375 = pneg %p99
        $region54: #{tpu_custom_call.1} parent=47 // pred_check_branch
          %377 = sbr.rel (%p375) target = $region56
        $region55: #{tpu_custom_call.1} parent=47 // pred_region
          %378 = dma.done %s371, 64
        $region56: #{tpu_custom_call.1} parent=47 // pred_fallthru
          _
        // Predicated region
        $region57: #{tpu_custom_call.1} parent=47 // pred_check
          %p379 = pneg %p120
        $region58: #{tpu_custom_call.1} parent=47 // pred_check_branch
          %381 = sbr.rel (%p379) target = $region60
        $region59: #{tpu_custom_call.1} parent=47 // pred_region
          %382 = dma.done [#allocation10], 256
        $region60: #{tpu_custom_call.1} parent=47 // pred_fallthru
          _
        // Predicated region
        $region61: #{tpu_custom_call.1} parent=47 // pred_check
          %p383 = pneg %p141
        $region62: #{tpu_custom_call.1} parent=47 // pred_check_branch
          %385 = sbr.rel (%p383) target = $region64
        $region63: #{tpu_custom_call.1} parent=47 // pred_region
          %386 = dma.done [#allocation13], 256
        $region64: #{tpu_custom_call.1} parent=47 // pred_fallthru
          _
        // Predicated region
        $region65: #{tpu_custom_call.1} parent=47 // pred_check
          %p387 = pneg %p162
        $region66: #{tpu_custom_call.1} parent=47 // pred_check_branch
          %389 = sbr.rel (%p387) target = $region68
        $region67: #{tpu_custom_call.1} parent=47 // pred_region
          %390 = dma.done [#allocation13], 256
        $region68: #{tpu_custom_call.1} parent=47 // pred_fallthru
          _
        // Predicated region
        $region69: #{tpu_custom_call.1} parent=47 // pred_check
          %p391 = pneg %p183
        $region70: #{tpu_custom_call.1} parent=47 // pred_check_branch
          %393 = sbr.rel (%p391) target = $region72
        $region71: #{tpu_custom_call.1} parent=47 // pred_region
          %394 = dma.done [#allocation16], 256
        $region72: #{tpu_custom_call.1} parent=47 // pred_fallthru
          _
        // Predicated region
        $region73: #{tpu_custom_call.1} parent=47 // pred_check
          %p395 = pneg %p204
        $region74: #{tpu_custom_call.1} parent=47 // pred_check_branch
          %397 = sbr.rel (%p395) target = $region76
        $region75: #{tpu_custom_call.1} parent=47 // pred_region
          %398 = dma.done [#allocation16], 16
        $region76: #{tpu_custom_call.1} parent=47 // pred_fallthru
          _
        %s399 = sand.u32 %s58, 1
        %s400 = scalar_lea.sflag [#allocation7], %s399
        %s401 = sand.u32 %s58, 1
        %s402 = smul.addr %s401, 4
        %s403 = scalar_lea.vmem [#allocation6], %s402
        %p404 = pneg %p71
        %p405 = pneg %p68
        %s406 = sand.u32 %s29, 1
        %s407 = scalar_lea.sflag [#allocation10], %s406
        %s408 = sand.u32 %s86, 1
        %s409 = smul.addr %s408, 4
        %s410 = scalar_lea.vmem [#allocation9], %s409
        %p411 = pneg %p99
        %p412 = pneg %p96
        %p413 = pneg %p120
        %p414 = pneg %p117
        %p415 = pneg %p141
        %p416 = pneg %p138
        %p417 = pneg %p162
        %p418 = pneg %p159
        %p419 = pneg %p183
        %p420 = pneg %p180
        %p421 = pneg %p204
        %p422 = pneg %p201
        %p423 = pneg %p232
        %p424 = pneg %p229
        %s425 = sand.u32 %s219, 1
        %s426 = scalar_lea.sflag [#allocation8], %s425
        %s427 = sand.u32 %s219, 1
        %s428 = smul.addr %s427, 8
        %s429 = scalar_lea.vmem [#allocation18], %s428
        %p431 = scmp.eq.s32.totalorder %s36, 0
        // Predicated region
        $region77: #{tpu_custom_call.1} parent=47 // pred_check
          %p432 = pneg %p431
        $region78: #{tpu_custom_call.1} parent=47 // pred_check_branch
          %434 = sbr.rel (%p432) target = $region80
        $region79: #{tpu_custom_call.1} parent=47 // pred_region
          %v435 = vld [vmem:[%s365] sm:$0xf]
          %v436 = vld [vmem:[#allocation11] sm:$0xf]
          %v437 = vld [vmem:[#allocation11 + $0x4] sm:$0xf]
          %v438 = vld [vmem:[#allocation11 + $0x8] sm:$0xf]
          %v439 = vld [vmem:[#allocation11 + $0xc] sm:$0xf]
          %v444 = vunpack.c.l.b16 %v436
          %v445 = vunpack.c.l.b16 %v437
          %v446 = vunpack.c.l.b16 %v438
          %v447 = vunpack.c.l.b16 %v439
          %v448 = vpack.c.b16 %v445, %v444
          %v449 = vpack.c.b16 %v447, %v446
          %vm452 = vcmask 261120
          %v454 = vsel %vm452, %v435, 0
          %456 = vmatprep.subr.bf16.mxu0 0
          %457 = vmatpush1.bf16.msra.mxu0 %v448
          %458 = vmatprep.subr.bf16.mxu0 0
          %459 = vmatpush1.bf16.msra.mxu0 %v449
          %460 = vmatprep.subr.bf16.mxu0 0
          %461 = vmatpush1.bf16.msra.mxu0 0
          %462 = vmatprep.subr.bf16.mxu0 0
          %463 = vmatpush1.bf16.msra.mxu0 0
          %464 = vmatprep.subr.bf16.mxu0 0
          %465 = vmatpush1.bf16.msra.mxu0 0
          %466 = vmatprep.subr.bf16.mxu0 0
          %467 = vmatpush1.bf16.msra.mxu0 0
          %468 = vmatprep.subr.bf16.mxu0 0
          %469 = vmatpush1.bf16.msra.mxu0 0
          %470 = vmatprep.subr.bf16.mxu0 0
          %471 = vmatpush1.bf16.msra.mxu0 0
          %472 = vmatprep.subr.bf16.mxu0 0
          %473 = vmatpush1.bf16.msra.mxu0 0
          %474 = vmatprep.subr.bf16.mxu0 0
          %475 = vmatpush1.bf16.msra.mxu0 0
          %476 = vmatprep.subr.bf16.mxu0 0
          %477 = vmatpush1.bf16.msra.mxu0 0
          %478 = vmatprep.subr.bf16.mxu0 0
          %479 = vmatpush1.bf16.msra.mxu0 0
          %480 = vmatprep.subr.bf16.mxu0 0
          %481 = vmatpush1.bf16.msra.mxu0 0
          %482 = vmatprep.subr.bf16.mxu0 0
          %483 = vmatpush1.bf16.msra.mxu0 0
          %484 = vmatprep.subr.bf16.mxu0 0
          %485 = vmatpush1.bf16.msra.mxu0 0
          %486 = vmatprep.subr.bf16.mxu0 0
          %487 = vmatpush1.bf16.msra.mxu0 0
          %488 = vmatprep.mubr.bf16.mxu0 0
          %489 = vmatmul.mubr.bf16.gmra.mrb[0].mxu0 %v454
          %v490 = vpop.f32.mrb[0].mxu0
          %v491 = vadd.f32 0.0, %v490
          %v492 = vpop.f32.mrb[0].mxu0
          %v493 = vpop.f32.mrb[0].mxu0
          %v494 = vpop.f32.mrb[0].mxu0
          %495 = vdwg.mxu0
          %v496 = vmul.f32 %v491, 0.25
          %v497 = vpack.c.bf16 %v496, %v496
          %vm498 = vcmask 125952
          %499 = vst.msk [vmem:[#allocation2] sm:$0xf] %vm498, %v497
          %v501 = vunpack.c.l.b16 %v497
          %v502 = vpack.c.b16 %v501, %v501
          %503 = vrot.lane.b32.xlu0 %v502, 112
          %v504 = vpop.permute.xlu0 %503
          %s506 = scalar_lea.vmem [#allocation2], 4
          %507 = vst.msk [vmem:[%s506] sm:$0xf] %vm498, %v504
          %vm508 = vcmask 7168
          %509 = vst.msk [vmem:[#allocation3] sm:$0xff] %vm508, -inf
          %510 = vst.msk [vmem:[#allocation3 + $0x8] sm:$0xff] %vm508, -inf
          %511 = vst.msk [vmem:[#allocation4] sm:$0xff] %vm508, 0.0
          %512 = vst.msk [vmem:[#allocation4 + $0x8] sm:$0xff] %vm508, 0.0
          %vm513 = vcmask 130048
          %514 = vst.msk [vmem:[#allocation5] sm:$0xff] %vm513, 0.0
          %515 = vst.msk [vmem:[#allocation5 + $0x8] sm:$0xff] %vm513, 0.0
        $region80: #{tpu_custom_call.1} parent=47 // pred_fallthru
          _
        %v516 = vld [vmem:[%s374] sm:$0xf]
        %v517 = vld [vmem:[#allocation12] sm:$0xf]
        %v518 = vld [vmem:[#allocation12 + $0x4] sm:$0xf]
        %v519 = vld [vmem:[#allocation12 + $0x8] sm:$0xf]
        %v520 = vld [vmem:[#allocation12 + $0xc] sm:$0xf]
        %v525 = vunpack.c.l.b16 %v517
        %v526 = vunpack.c.l.b16 %v518
        %v527 = vunpack.c.l.b16 %v519
        %v528 = vunpack.c.l.b16 %v520
        %v529 = vpack.c.b16 %v526, %v525
        %v530 = vpack.c.b16 %v528, %v527
        %vm533 = vcmask 261120
        %v535 = vsel %vm533, %v516, 0
        %537 = vmatprep.subr.bf16.mxu0 0
        %538 = vmatpush1.bf16.msra.mxu0 %v529
        %539 = vmatprep.subr.bf16.mxu0 0
        %540 = vmatpush1.bf16.msra.mxu0 %v530
        %541 = vmatprep.subr.bf16.mxu0 0
        %542 = vmatpush1.bf16.msra.mxu0 0
        %543 = vmatprep.subr.bf16.mxu0 0
        %544 = vmatpush1.bf16.msra.mxu0 0
        %545 = vmatprep.subr.bf16.mxu0 0
        %546 = vmatpush1.bf16.msra.mxu0 0
        %547 = vmatprep.subr.bf16.mxu0 0
        %548 = vmatpush1.bf16.msra.mxu0 0
        %549 = vmatprep.subr.bf16.mxu0 0
        %550 = vmatpush1.bf16.msra.mxu0 0
        %551 = vmatprep.subr.bf16.mxu0 0
        %552 = vmatpush1.bf16.msra.mxu0 0
        %553 = vmatprep.subr.bf16.mxu0 0
        %554 = vmatpush1.bf16.msra.mxu0 0
        %555 = vmatprep.subr.bf16.mxu0 0
        %556 = vmatpush1.bf16.msra.mxu0 0
        %557 = vmatprep.subr.bf16.mxu0 0
        %558 = vmatpush1.bf16.msra.mxu0 0
        %559 = vmatprep.subr.bf16.mxu0 0
        %560 = vmatpush1.bf16.msra.mxu0 0
        %561 = vmatprep.subr.bf16.mxu0 0
        %562 = vmatpush1.bf16.msra.mxu0 0
        %563 = vmatprep.subr.bf16.mxu0 0
        %564 = vmatpush1.bf16.msra.mxu0 0
        %565 = vmatprep.subr.bf16.mxu0 0
        %566 = vmatpush1.bf16.msra.mxu0 0
        %567 = vmatprep.subr.bf16.mxu0 0
        %568 = vmatpush1.bf16.msra.mxu0 0
        %569 = vmatprep.mubr.bf16.mxu0 0
        %570 = vmatmul.mubr.bf16.gmra.mrb[0].mxu0 %v535
        %v571 = vpop.f32.mrb[0].mxu0
        %v572 = vadd.f32 0.0, %v571
        %v573 = vpop.f32.mrb[0].mxu0
        %v574 = vpop.f32.mrb[0].mxu0
        %v575 = vpop.f32.mrb[0].mxu0
        %576 = vdwg.mxu0
        %v577 = vpack.c.bf16 %v572, %v572
        %v578 = vld [vmem:[#allocation14] sm:$0xf]
        %v579 = vld [vmem:[#allocation14 + $0x4] sm:$0xf]
        %v580 = vld [vmem:[#allocation14 + $0x8] sm:$0xf]
        %v581 = vld [vmem:[#allocation14 + $0xc] sm:$0xf]
        %v586 = vunpack.c.l.b16 %v578
        %v587 = vunpack.c.l.b16 %v579
        %v588 = vunpack.c.l.b16 %v580
        %v589 = vunpack.c.l.b16 %v581
        %v590 = vpack.c.b16 %v587, %v586
        %v591 = vpack.c.b16 %v589, %v588
        %594 = vmatprep.subr.bf16.mxu0 0
        %595 = vmatpush1.bf16.msra.mxu0 %v590
        %596 = vmatprep.subr.bf16.mxu0 0
        %597 = vmatpush1.bf16.msra.mxu0 %v591
        %598 = vmatprep.subr.bf16.mxu0 0
        %599 = vmatpush1.bf16.msra.mxu0 0
        %600 = vmatprep.subr.bf16.mxu0 0
        %601 = vmatpush1.bf16.msra.mxu0 0
        %602 = vmatprep.subr.bf16.mxu0 0
        %603 = vmatpush1.bf16.msra.mxu0 0
        %604 = vmatprep.subr.bf16.mxu0 0
        %605 = vmatpush1.bf16.msra.mxu0 0
        %606 = vmatprep.subr.bf16.mxu0 0
        %607 = vmatpush1.bf16.msra.mxu0 0
        %608 = vmatprep.subr.bf16.mxu0 0
        %609 = vmatpush1.bf16.msra.mxu0 0
        %610 = vmatprep.subr.bf16.mxu0 0
        %611 = vmatpush1.bf16.msra.mxu0 0
        %612 = vmatprep.subr.bf16.mxu0 0
        %613 = vmatpush1.bf16.msra.mxu0 0
        %614 = vmatprep.subr.bf16.mxu0 0
        %615 = vmatpush1.bf16.msra.mxu0 0
        %616 = vmatprep.subr.bf16.mxu0 0
        %617 = vmatpush1.bf16.msra.mxu0 0
        %618 = vmatprep.subr.bf16.mxu0 0
        %619 = vmatpush1.bf16.msra.mxu0 0
        %620 = vmatprep.subr.bf16.mxu0 0
        %621 = vmatpush1.bf16.msra.mxu0 0
        %622 = vmatprep.subr.bf16.mxu0 0
        %623 = vmatpush1.bf16.msra.mxu0 0
        %624 = vmatprep.subr.bf16.mxu0 0
        %625 = vmatpush1.bf16.msra.mxu0 0
        %626 = vmatprep.mubr.bf16.mxu0 0
        %627 = vmatmul.mubr.bf16.gmra.mrb[0].mxu0 %v535
        %v628 = vpop.f32.mrb[0].mxu0
        %v629 = vadd.f32 0.0, %v628
        %v630 = vpop.f32.mrb[0].mxu0
        %v631 = vpop.f32.mrb[0].mxu0
        %v632 = vpop.f32.mrb[0].mxu0
        %633 = vdwg.mxu0
        %v634 = vpack.c.bf16 %v629, %v629
        %v635 = vld [vmem:[#allocation2] sm:$0xf]
        %vm636 = vcmask 130048
        %v638 = vsel %vm636, %v635, 0
        %v641 = vsel %vm636, %v577, 0
        %643 = vmatprep.subr.bf16.mxu0 0
        %644 = vmatpush1.bf16.xpose.msra.mxu0 %v641
        %645 = vmatprep.subr.bf16.mxu0 0
        %646 = vmatpush1.bf16.xpose.msra.mxu0 0
        %647 = vmatprep.subr.bf16.mxu0 0
        %648 = vmatpush1.bf16.xpose.msra.mxu0 0
        %649 = vmatprep.subr.bf16.mxu0 0
        %650 = vmatpush1.bf16.xpose.msra.mxu0 0
        %651 = vmatprep.subr.bf16.mxu0 0
        %652 = vmatpush1.bf16.xpose.msra.mxu0 0
        %653 = vmatprep.subr.bf16.mxu0 0
        %654 = vmatpush1.bf16.xpose.msra.mxu0 0
        %655 = vmatprep.subr.bf16.mxu0 0
        %656 = vmatpush1.bf16.xpose.msra.mxu0 0
        %657 = vmatprep.subr.bf16.mxu0 0
        %658 = vmatpush1.bf16.xpose.msra.mxu0 0
        %659 = vmatprep.subr.bf16.mxu0 0
        %660 = vmatpush1.bf16.xpose.msra.mxu0 0
        %661 = vmatprep.subr.bf16.mxu0 0
        %662 = vmatpush1.bf16.xpose.msra.mxu0 0
        %663 = vmatprep.subr.bf16.mxu0 0
        %664 = vmatpush1.bf16.xpose.msra.mxu0 0
        %665 = vmatprep.subr.bf16.mxu0 0
        %666 = vmatpush1.bf16.xpose.msra.mxu0 0
        %667 = vmatprep.subr.bf16.mxu0 0
        %668 = vmatpush1.bf16.xpose.msra.mxu0 0
        %669 = vmatprep.subr.bf16.mxu0 0
        %670 = vmatpush1.bf16.xpose.msra.mxu0 0
        %671 = vmatprep.subr.bf16.mxu0 0
        %672 = vmatpush1.bf16.xpose.msra.mxu0 0
        %673 = vmatprep.subr.bf16.mxu0 0
        %674 = vmatpush1.bf16.xpose.msra.mxu0 0
        %675 = vmatprep.mubr.bf16.mxu0 0
        %676 = vmatmul.mubr.bf16.gmra.mrb[0].mxu0 %v638
        %v677 = vpop.f32.mrb[0].mxu0
        %v678 = vadd.f32 0.0, %v677
        %v679 = vpop.f32.mrb[0].mxu0
        %v680 = vpop.f32.mrb[0].mxu0
        %v681 = vpop.f32.mrb[0].mxu0
        %682 = vdwg.mxu0
        %v683 = vld [vmem:[#allocation3] sm:$0xff]
        %vm684 = vcmask 64512
        %v685 = vsel %vm684, %v678, -inf
        %686 = vmax.xlane.f32.xlu0 %v685
        %v687 = vpop.xlane.xlu0 %686
        %v688 = vmax.f32 %v683, %v687
        %v689 = vsub.f32 %v683, %v688
        %v690 = vmul.f32 %v689, 1.442695
        %v691 = vpow.pop %v690
        %693 = vset.pattern.permute.xlu0 0
        %694 = vperm.xlu0 %693, %v688
        %v695 = vpop.permute.xlu0 %694
        %v697 = vsub.f32 %v678, %v695
        %v698 = vmul.f32 %v697, 1.442695
        %v699 = vpow.pop %v698
        %v700 = vld [vmem:[#allocation4] sm:$0xff]
        %v701 = vmul.f32 %v691, %v700
        %v702 = vsel %vm684, %v699, 0.0
        %703 = vadd.xlane.f32.xlu0 %v702
        %v704 = vpop.xlane.xlu0 %703
        %v705 = vadd.f32 %v701, %v704
        %vm706 = vcmask 7168
        %707 = vst.msk [vmem:[#allocation4] sm:$0xff] %vm706, %v705
        %v708 = vld [vmem:[#allocation5] sm:$0xff]
        %710 = vset.pattern.permute.xlu0 0
        %711 = vperm.xlu0 %710, %v691
        %v712 = vpop.permute.xlu0 %711
        %v714 = vmul.f32 %v712, %v708
        %v715 = vpack.c.bf16 %v699, %v699
        %v717 = vsel %vm684, %v715, 0
        %vm719 = vcmask 1043456
        %v721 = vsel %vm719, %v634, 0
        %723 = vmatprep.subr.bf16.mxu0 0
        %724 = vmatpush1.bf16.msra.mxu0 %v721
        %725 = vmatprep.subr.bf16.mxu0 0
        %726 = vmatpush1.bf16.msra.mxu0 0
        %727 = vmatprep.subr.bf16.mxu0 0
        %728 = vmatpush1.bf16.msra.mxu0 0
        %729 = vmatprep.subr.bf16.mxu0 0
        %730 = vmatpush1.bf16.msra.mxu0 0
        %731 = vmatprep.subr.bf16.mxu0 0
        %732 = vmatpush1.bf16.msra.mxu0 0
        %733 = vmatprep.subr.bf16.mxu0 0
        %734 = vmatpush1.bf16.msra.mxu0 0
        %735 = vmatprep.subr.bf16.mxu0 0
        %736 = vmatpush1.bf16.msra.mxu0 0
        %737 = vmatprep.subr.bf16.mxu0 0
        %738 = vmatpush1.bf16.msra.mxu0 0
        %739 = vmatprep.subr.bf16.mxu0 0
        %740 = vmatpush1.bf16.msra.mxu0 0
        %741 = vmatprep.subr.bf16.mxu0 0
        %742 = vmatpush1.bf16.msra.mxu0 0
        %743 = vmatprep.subr.bf16.mxu0 0
        %744 = vmatpush1.bf16.msra.mxu0 0
        %745 = vmatprep.subr.bf16.mxu0 0
        %746 = vmatpush1.bf16.msra.mxu0 0
        %747 = vmatprep.subr.bf16.mxu0 0
        %748 = vmatpush1.bf16.msra.mxu0 0
        %749 = vmatprep.subr.bf16.mxu0 0
        %750 = vmatpush1.bf16.msra.mxu0 0
        %751 = vmatprep.subr.bf16.mxu0 0
        %752 = vmatpush1.bf16.msra.mxu0 0
        %753 = vmatprep.subr.bf16.mxu0 0
        %754 = vmatpush1.bf16.msra.mxu0 0
        %755 = vmatprep.mubr.bf16.mxu0 0
        %756 = vmatmul.mubr.bf16.gmra.mrb[0].mxu0 %v717
        %v757 = vpop.f32.mrb[0].mxu0
        %v758 = vadd.f32 0.0, %v757
        %v759 = vpop.f32.mrb[0].mxu0
        %v760 = vpop.f32.mrb[0].mxu0
        %v761 = vpop.f32.mrb[0].mxu0
        %762 = vdwg.mxu0
        %v763 = vadd.f32 %v714, %v758
        %764 = vst.msk [vmem:[#allocation5] sm:$0xff] %vm636, %v763
        %765 = vst.msk [vmem:[#allocation3] sm:$0xff] %vm706, %v688
        %s766 = scalar_lea.vmem [#allocation2], 4
        %v767 = vld [vmem:[%s766] sm:$0xf]
        %769 = vrot.lane.b32.xlu0 %v577, 112
        %v770 = vpop.permute.xlu0 %769
        %v772 = vsel %vm636, %v767, 0
        %v775 = vsel %vm636, %v770, 0
        %777 = vmatprep.subr.bf16.mxu0 0
        %778 = vmatpush1.bf16.xpose.msra.mxu0 %v775
        %779 = vmatprep.subr.bf16.mxu0 0
        %780 = vmatpush1.bf16.xpose.msra.mxu0 0
        %781 = vmatprep.subr.bf16.mxu0 0
        %782 = vmatpush1.bf16.xpose.msra.mxu0 0
        %783 = vmatprep.subr.bf16.mxu0 0
        %784 = vmatpush1.bf16.xpose.msra.mxu0 0
        %785 = vmatprep.subr.bf16.mxu0 0
        %786 = vmatpush1.bf16.xpose.msra.mxu0 0
        %787 = vmatprep.subr.bf16.mxu0 0
        %788 = vmatpush1.bf16.xpose.msra.mxu0 0
        %789 = vmatprep.subr.bf16.mxu0 0
        %790 = vmatpush1.bf16.xpose.msra.mxu0 0
        %791 = vmatprep.subr.bf16.mxu0 0
        %792 = vmatpush1.bf16.xpose.msra.mxu0 0
        %793 = vmatprep.subr.bf16.mxu0 0
        %794 = vmatpush1.bf16.xpose.msra.mxu0 0
        %795 = vmatprep.subr.bf16.mxu0 0
        %796 = vmatpush1.bf16.xpose.msra.mxu0 0
        %797 = vmatprep.subr.bf16.mxu0 0
        %798 = vmatpush1.bf16.xpose.msra.mxu0 0
        %799 = vmatprep.subr.bf16.mxu0 0
        %800 = vmatpush1.bf16.xpose.msra.mxu0 0
        %801 = vmatprep.subr.bf16.mxu0 0
        %802 = vmatpush1.bf16.xpose.msra.mxu0 0
        %803 = vmatprep.subr.bf16.mxu0 0
        %804 = vmatpush1.bf16.xpose.msra.mxu0 0
        %805 = vmatprep.subr.bf16.mxu0 0
        %806 = vmatpush1.bf16.xpose.msra.mxu0 0
        %807 = vmatprep.subr.bf16.mxu0 0
        %808 = vmatpush1.bf16.xpose.msra.mxu0 0
        %809 = vmatprep.mubr.bf16.mxu0 0
        %810 = vmatmul.mubr.bf16.gmra.mrb[0].mxu0 %v772
        %v811 = vpop.f32.mrb[0].mxu0
        %v812 = vadd.f32 0.0, %v811
        %v813 = vpop.f32.mrb[0].mxu0
        %v814 = vpop.f32.mrb[0].mxu0
        %v815 = vpop.f32.mrb[0].mxu0
        %816 = vdwg.mxu0
        %s817 = scalar_lea.vmem [#allocation3], 8
        %v818 = vld [vmem:[%s817] sm:$0xff]
        %v819 = vsel %vm684, %v812, -inf
        %820 = vmax.xlane.f32.xlu0 %v819
        %v821 = vpop.xlane.xlu0 %820
        %v822 = vmax.f32 %v818, %v821
        %v823 = vsub.f32 %v818, %v822
        %v824 = vmul.f32 %v823, 1.442695
        %v825 = vpow.pop %v824
        %827 = vset.pattern.permute.xlu0 0
        %828 = vperm.xlu0 %827, %v822
        %v829 = vpop.permute.xlu0 %828
        %v831 = vsub.f32 %v812, %v829
        %v832 = vmul.f32 %v831, 1.442695
        %v833 = vpow.pop %v832
        %s834 = scalar_lea.vmem [#allocation4], 8
        %v835 = vld [vmem:[%s834] sm:$0xff]
        %v836 = vmul.f32 %v825, %v835
        %v837 = vsel %vm684, %v833, 0.0
        %838 = vadd.xlane.f32.xlu0 %v837
        %v839 = vpop.xlane.xlu0 %838
        %v840 = vadd.f32 %v836, %v839
        %841 = vst.msk [vmem:[%s834] sm:$0xff] %vm706, %v840
        %s842 = scalar_lea.vmem [#allocation5], 8
        %v843 = vld [vmem:[%s842] sm:$0xff]
        %845 = vset.pattern.permute.xlu0 0
        %846 = vperm.xlu0 %845, %v825
        %v847 = vpop.permute.xlu0 %846
        %v849 = vmul.f32 %v847, %v843
        %v850 = vpack.c.bf16 %v833, %v833
        %852 = vrot.lane.b32.xlu0 %v634, 112
        %v853 = vpop.permute.xlu0 %852
        %v855 = vsel %vm684, %v850, 0
        %v858 = vsel %vm719, %v853, 0
        %860 = vmatprep.subr.bf16.mxu0 0
        %861 = vmatpush1.bf16.msra.mxu0 %v858
        %862 = vmatprep.subr.bf16.mxu0 0
        %863 = vmatpush1.bf16.msra.mxu0 0
        %864 = vmatprep.subr.bf16.mxu0 0
        %865 = vmatpush1.bf16.msra.mxu0 0
        %866 = vmatprep.subr.bf16.mxu0 0
        %867 = vmatpush1.bf16.msra.mxu0 0
        %868 = vmatprep.subr.bf16.mxu0 0
        %869 = vmatpush1.bf16.msra.mxu0 0
        %870 = vmatprep.subr.bf16.mxu0 0
        %871 = vmatpush1.bf16.msra.mxu0 0
        %872 = vmatprep.subr.bf16.mxu0 0
        %873 = vmatpush1.bf16.msra.mxu0 0
        %874 = vmatprep.subr.bf16.mxu0 0
        %875 = vmatpush1.bf16.msra.mxu0 0
        %876 = vmatprep.subr.bf16.mxu0 0
        %877 = vmatpush1.bf16.msra.mxu0 0
        %878 = vmatprep.subr.bf16.mxu0 0
        %879 = vmatpush1.bf16.msra.mxu0 0
        %880 = vmatprep.subr.bf16.mxu0 0
        %881 = vmatpush1.bf16.msra.mxu0 0
        %882 = vmatprep.subr.bf16.mxu0 0
        %883 = vmatpush1.bf16.msra.mxu0 0
        %884 = vmatprep.subr.bf16.mxu0 0
        %885 = vmatpush1.bf16.msra.mxu0 0
        %886 = vmatprep.subr.bf16.mxu0 0
        %887 = vmatpush1.bf16.msra.mxu0 0
        %888 = vmatprep.subr.bf16.mxu0 0
        %889 = vmatpush1.bf16.msra.mxu0 0
        %890 = vmatprep.subr.bf16.mxu0 0
        %891 = vmatpush1.bf16.msra.mxu0 0
        %892 = vmatprep.mubr.bf16.mxu0 0
        %893 = vmatmul.mubr.bf16.gmra.mrb[0].mxu0 %v855
        %v894 = vpop.f32.mrb[0].mxu0
        %v895 = vadd.f32 0.0, %v894
        %v896 = vpop.f32.mrb[0].mxu0
        %v897 = vpop.f32.mrb[0].mxu0
        %v898 = vpop.f32.mrb[0].mxu0
        %899 = vdwg.mxu0
        %v900 = vadd.f32 %v849, %v895
        %901 = vst.msk [vmem:[%s842] sm:$0xff] %vm636, %v900
        %902 = vst.msk [vmem:[%s817] sm:$0xff] %vm706, %v822
        %p903 = scmp.eq.s32.totalorder %s36, 1
        // Predicated region
        $region81: #{tpu_custom_call.1} parent=47 // pred_check
          %p904 = pneg %p903
        $region82: #{tpu_custom_call.1} parent=47 // pred_check_branch
          %906 = sbr.rel (%p904) target = $region84
        $region83: #{tpu_custom_call.1} parent=47 // pred_region
          %v907 = vld [vmem:[#allocation4] sm:$0xff]
          %v908 = vld [vmem:[#allocation4 + $0x8] sm:$0xff]
          %v909 = vrcp.pop %v907
          %v910 = vrcp.pop %v908
          %v911 = vld [vmem:[#allocation5] sm:$0xff]
          %913 = vset.pattern.permute.xlu0 0
          %914 = vperm.xlu0 %913, %v909
          %v915 = vpop.permute.xlu0 %914
          %v917 = vmul.f32 %v911, %v915
          %v918 = vpack.c.bf16 %v917, %v917
          %v919 = vld [vmem:[#allocation15] sm:$0xf]
          %v920 = vld [vmem:[#allocation15 + $0x4] sm:$0xf]
          %v921 = vld [vmem:[%s842] sm:$0xff]
          %923 = vset.pattern.permute.xlu0 0
          %924 = vperm.xlu0 %923, %v910
          %v925 = vpop.permute.xlu0 %924
          %v927 = vmul.f32 %v921, %v925
          %v928 = vpack.c.bf16 %v927, %v927
          %s929 = scalar_lea.vmem [#allocation15], 8
          %v930 = vld [vmem:[%s929] sm:$0xf]
          %v931 = vld [vmem:[%s929 + $0x4] sm:$0xf]
          %v934 = vunpack.c.l.b16 %v930
          %v935 = vunpack.c.l.b16 %v931
          %v936 = vpack.c.b16 %v935, %v934
          %v939 = vsel %vm636, %v928, 0
          %941 = vmatprep.subr.bf16.mxu0 0
          %942 = vmatpush1.bf16.msra.mxu0 %v936
          %943 = vmatprep.subr.bf16.mxu0 0
          %944 = vmatpush1.bf16.msra.mxu0 0
          %945 = vmatprep.subr.bf16.mxu0 0
          %946 = vmatpush1.bf16.msra.mxu0 0
          %947 = vmatprep.subr.bf16.mxu0 0
          %948 = vmatpush1.bf16.msra.mxu0 0
          %949 = vmatprep.subr.bf16.mxu0 0
          %950 = vmatpush1.bf16.msra.mxu0 0
          %951 = vmatprep.subr.bf16.mxu0 0
          %952 = vmatpush1.bf16.msra.mxu0 0
          %953 = vmatprep.subr.bf16.mxu0 0
          %954 = vmatpush1.bf16.msra.mxu0 0
          %955 = vmatprep.subr.bf16.mxu0 0
          %956 = vmatpush1.bf16.msra.mxu0 0
          %957 = vmatprep.subr.bf16.mxu0 0
          %958 = vmatpush1.bf16.msra.mxu0 0
          %959 = vmatprep.subr.bf16.mxu0 0
          %960 = vmatpush1.bf16.msra.mxu0 0
          %961 = vmatprep.subr.bf16.mxu0 0
          %962 = vmatpush1.bf16.msra.mxu0 0
          %963 = vmatprep.subr.bf16.mxu0 0
          %964 = vmatpush1.bf16.msra.mxu0 0
          %965 = vmatprep.subr.bf16.mxu0 0
          %966 = vmatpush1.bf16.msra.mxu0 0
          %967 = vmatprep.subr.bf16.mxu0 0
          %968 = vmatpush1.bf16.msra.mxu0 0
          %969 = vmatprep.subr.bf16.mxu0 0
          %970 = vmatpush1.bf16.msra.mxu0 0
          %971 = vmatprep.subr.bf16.mxu0 0
          %972 = vmatpush1.bf16.msra.mxu0 0
          %973 = vmatprep.mubr.bf16.mxu0 0
          %974 = vmatmul.mubr.bf16.gmra.mrb[0].mxu0 %v939
          %v975 = vpop.f32.mrb[0].mxu0
          %v976 = vadd.f32 0.0, %v975
          %v977 = vpop.f32.mrb[0].mxu0
          %v978 = vpop.f32.mrb[0].mxu0
          %v979 = vpop.f32.mrb[0].mxu0
          %980 = vdwg.mxu0
          %v983 = vunpack.c.l.b16 %v919
          %v984 = vunpack.c.l.b16 %v920
          %v985 = vpack.c.b16 %v984, %v983
          %v988 = vsel %vm636, %v918, 0
          %990 = vmatprep.subr.bf16.mxu0 0
          %991 = vmatpush1.bf16.msra.mxu0 %v985
          %992 = vmatprep.subr.bf16.mxu0 0
          %993 = vmatpush1.bf16.msra.mxu0 0
          %994 = vmatprep.subr.bf16.mxu0 0
          %995 = vmatpush1.bf16.msra.mxu0 0
          %996 = vmatprep.subr.bf16.mxu0 0
          %997 = vmatpush1.bf16.msra.mxu0 0
          %998 = vmatprep.subr.bf16.mxu0 0
          %999 = vmatpush1.bf16.msra.mxu0 0
          %1000 = vmatprep.subr.bf16.mxu0 0
          %1001 = vmatpush1.bf16.msra.mxu0 0
          %1002 = vmatprep.subr.bf16.mxu0 0
          %1003 = vmatpush1.bf16.msra.mxu0 0
          %1004 = vmatprep.subr.bf16.mxu0 0
          %1005 = vmatpush1.bf16.msra.mxu0 0
          %1006 = vmatprep.subr.bf16.mxu0 0
          %1007 = vmatpush1.bf16.msra.mxu0 0
          %1008 = vmatprep.subr.bf16.mxu0 0
          %1009 = vmatpush1.bf16.msra.mxu0 0
          %1010 = vmatprep.subr.bf16.mxu0 0
          %1011 = vmatpush1.bf16.msra.mxu0 0
          %1012 = vmatprep.subr.bf16.mxu0 0
          %1013 = vmatpush1.bf16.msra.mxu0 0
          %1014 = vmatprep.subr.bf16.mxu0 0
          %1015 = vmatpush1.bf16.msra.mxu0 0
          %1016 = vmatprep.subr.bf16.mxu0 0
          %1017 = vmatpush1.bf16.msra.mxu0 0
          %1018 = vmatprep.subr.bf16.mxu0 0
          %1019 = vmatpush1.bf16.msra.mxu0 0
          %1020 = vmatprep.subr.bf16.mxu0 0
          %1021 = vmatpush1.bf16.msra.mxu0 0
          %1022 = vmatprep.mubr.bf16.mxu0 0
          %1023 = vmatmul.mubr.bf16.gmra.mrb[0].mxu0 %v988
          %v1024 = vpop.f32.mrb[0].mxu0
          %v1025 = vadd.f32 %v976, %v1024
          %v1026 = vpop.f32.mrb[0].mxu0
          %v1027 = vpop.f32.mrb[0].mxu0
          %v1028 = vpop.f32.mrb[0].mxu0
          %1029 = vdwg.mxu0
          %v1030 = vld [vmem:[#allocation17] sm:$0x1]
          %v1032 = vlaneseq
          %v1033 = vshrl.u32 %v1032, 7
          %v1034 = vsub.s32 0, %v1033
          %v1035 = vrot.slane %v1030, %v1034
          %v1037 = vadd.f32 %v1025, %v1035
          %1038 = vst.msk [vmem:[%s429] sm:$0xff] %vm533, %v1037
        $region84: #{tpu_custom_call.1} parent=47 // pred_fallthru
          _
        %s1039 = sand.u32 %s219, 1
        %s1040 = scalar_lea.sflag [#allocation8], %s1039
        %s1041 = sand.u32 %s219, 1
        %s1042 = smul.addr %s1041, 8
        %s1043 = scalar_lea.vmem [#allocation18], %s1042
        // Predicated region
        $region85: #{tpu_custom_call.1} parent=47 // pred_check
          %p1044 = pneg %p229
        $region86: #{tpu_custom_call.1} parent=47 // pred_check_branch
          %1046 = sbr.rel (%p1044) target = $region88
        $region87: #{tpu_custom_call.1} parent=47 // pred_region
          %s1048 = ssub.s32 128, 128
          %1049 = vsyncadd %s1040, %s1048
          %s1050 = smul.addr %s34, 2
          %s1051 = sadd.s32 %s35, %s1050
          %s1052 = smul.addr %s1051, 128
          %s1053 = scalar_lea.hbm %s7, %s1052
          %s1055 = sshll.u32 %s1043, 4
          %s1056 = int_to_ptr.vmem [resolvable:$true] %s1055
          %1058 = dma.vmem_to_hbm [thread:$0]  %s1056, 128, %s1053, %s1040
        $region88: #{tpu_custom_call.1} parent=47 // pred_fallthru
          _
      $region48: #{tpu_custom_call.1} parent=5 // pred_fallthru
        _
      %p1059 = scmp.le.s32.totalorder 2, %s24
      // Predicated region
      $region89: #{tpu_custom_call.1} parent=5 // pred_check
        %p1060 = pneg %p1059
      $region90: #{tpu_custom_call.1} parent=5 // pred_check_branch
        %1062 = sbr.rel (%p1060) target = $region92
      $region91: #{tpu_custom_call.1} parent=5 // pred_region
        %s1063 = ssub.s32 %s24, 2
        // Predicated region
        $region93: #{tpu_custom_call.1} parent=91 // pred_check
          %p1064 = pneg %p235
        $region94: #{tpu_custom_call.1} parent=91 // pred_check_branch
          %1066 = sbr.rel (%p1064) target = $region96
        $region95: #{tpu_custom_call.1} parent=91 // pred_region
          %s1067 = sand.u32 %s220, 1
          %s1068 = scalar_lea.sflag [#allocation8], %s1067
          %s1069 = sand.u32 %s220, 1
          %s1070 = smul.addr %s1069, 8
          %s1071 = scalar_lea.vmem [#allocation18], %s1070
          %1072 = dma.done %s1068, 128
        $region96: #{tpu_custom_call.1} parent=91 // pred_fallthru
          _
      $region92: #{tpu_custom_call.1} parent=5 // pred_fallthru
        _
    $region6: #{tpu_custom_call.1} parent=1 // loop_footer
      %s28 = sadd.s32 1, %s24
    $region7: #{tpu_custom_call.1} parent=1 // loop_footer_branch
      %23 = sbr.rel target = $region3
    $region8: #{tpu_custom_call.1} parent=1 // loop_exit
      _
    %1073 = vsyncpa [#allocation7], 1
    %s1074 = scalar_lea.sflag [#allocation7], 1
    %1075 = vsyncpa %s1074, 1
    %1076 = vsyncpa [#allocation10], 1
    %s1077 = scalar_lea.sflag [#allocation10], 1
    %1078 = vsyncpa %s1077, 1
    %1079 = vsyncpa [#allocation13], 1
    %1080 = vsyncpa [#allocation16], 1
    %1081 = vsyncpa [#allocation8], 1
    %s1082 = scalar_lea.sflag [#allocation8], 1
    %1083 = vsyncpa %s1082, 1

</llo_original>
